<compile_context>
chip_gen: v6e
topology: v6e:2x2x1
jax: 0.10.0
libtpu: 0.0.40
codegen_flags: <defaults>
</compile_context>

<pallas_src>
import jax
import jax.numpy as jnp
from jax.experimental import pallas as pl
from jax.experimental.pallas import tpu as pltpu


def _round_up(n, m):
    return ((n + m - 1) // m) * m


def _make_kernel(act_dtype):
    """Build the 6-layer MLP kernel. act_dtype is the storage dtype of inter-layer
    activations (f32, or bf16 on the fast path); matmuls always accumulate in f32."""

    def autoencoder_kernel(
        x_ref,
        w1_ref, b1_ref,
        w2_ref, b2_ref,
        w3_ref, b3_ref,
        w4_ref, b4_ref,
        w5_ref, b5_ref,
        w6_ref, b6_ref,
        out_ref,
    ):
        def layer(h, w_ref, b_ref):
            w = w_ref[...]
            # MXU matmul in the weight dtype (f32 or bf16), f32 accumulation;
            # bias add stays f32 on the VPU.
            return jnp.dot(h.astype(w.dtype), w,
                           preferred_element_type=jnp.float32) + b_ref[...]

        def relu(h):
            # ReLU in f32 on the VPU; store the intermediate in act_dtype (bf16 on
            # v6e/v7x fast path) to halve vreg / spill pressure between layers.
            return jnp.maximum(h, 0.0).astype(act_dtype)

        h = x_ref[...]

        # ---- encoder ----
        h = relu(layer(h, w1_ref, b1_ref))
        h = relu(layer(h, w2_ref, b2_ref))
        h = relu(layer(h, w3_ref, b3_ref))

        # ---- decoder ----
        h = relu(layer(h, w4_ref, b4_ref))
        h = relu(layer(h, w5_ref, b5_ref))
        h = jax.nn.sigmoid(layer(h, w6_ref, b6_ref))   # f32 sigmoid on the EUP

        out_ref[...] = h.astype(out_ref.dtype)

    return autoencoder_kernel


def autoencoder_forward(x, params, *, tile_b=256, weight_dtype=None,
                        prefer_multi_step=True, vmem_limit_bytes=None):
    """x: [B, input_dim] float32. params: list of 6 (W[in, out], b[1, out]) f32 arrays.

    weight_dtype: jnp.bfloat16 enables the fast path (bf16 weights + bf16 input/activations,
    f32 MXU accumulation, f32 bias/ReLU/sigmoid). Default None keeps everything f32.
    """
    B, input_dim = x.shape
    dims = [input_dim] + [w.shape[1] for w, _ in params]          # [d0, d1, ..., d6]
    padded = [_round_up(d, 128) for d in dims]                    # lane-dense widths

    compute_dtype = jnp.float32 if weight_dtype is None else jnp.dtype(weight_dtype)

    # ---- batch tiling ----
    # Multiple of 16: sublane-dense for f32 and packed-sublane-dense for bf16.
    Bp16 = _round_up(B, 16)
    tile_b = _round_up(max(16, min(tile_b, Bp16)), 16)
    # Prefer >=2 grid steps (v7x has 2 TensorCores) when the batch supports two >=128-row
    # tiles; otherwise a single full tile is best (v5e/v6e single TC).
    if prefer_multi_step and tile_b >= Bp16 and Bp16 >= 256:
        tile_b = _round_up(-(-Bp16 // 2), 16)
    Bp = _round_up(B, tile_b)

    # ---- pad & cast operands ----
    # Zero-pad the input (padded feature columns and padded batch rows are zero).
    xp = jnp.zeros((Bp, padded[0]), jnp.float32).at[:B, :input_dim].set(
        x.astype(jnp.float32))
    xp = xp.astype(compute_dtype)

    # Zero-pad weights to lane-dense shapes (optionally bf16); biases stay f32.
    flat = []
    for i, (w, b) in enumerate(params):
        pin, pout = padded[i], padded[i + 1]
        wp = jnp.zeros((pin, pout), jnp.float32).at[: w.shape[0], : w.shape[1]].set(w)
        if weight_dtype is not None:
            wp = wp.astype(weight_dtype)
        bp = jnp.zeros((1, pout), jnp.float32).at[:, : b.shape[1]].set(b.reshape(1, -1))
        flat.extend([wp, bp])

    grid = (Bp // tile_b,)

    def act_spec(width):
        return pl.BlockSpec((tile_b, width), lambda i: (i, 0))

    def const_spec(a):
        # Constant block index -> DMA'd once, resident in VMEM across all grid steps.
        return pl.BlockSpec(a.shape, lambda i: (0, 0))

    in_specs = [act_spec(padded[0])] + [const_spec(a) for a in flat]
    out_specs = act_spec(padded[-1])

    # ---- VMEM budget: derived from actual tile footprint (>=32 MiB, <=96 MiB) ----
    if vmem_limit_bytes is None:
        in_tile = tile_b * padded[0] * jnp.dtype(compute_dtype).itemsize
        out_tile = tile_b * padded[-1] * jnp.dtype(x.dtype).itemsize
        w_bytes = sum(int(a.size) * a.dtype.itemsize for a in flat)
        interm = 3 * tile_b * max(padded) * 4            # live f32 intermediates / spill headroom
        need = 2 * (in_tile + out_tile) + 2 * w_bytes + interm + (4 << 20)
        vmem_limit_bytes = int(min(max(32 << 20, need), 96 << 20))

    # ---- advisory cost estimate ----
    flops = 2 * Bp * sum(padded[i] * padded[i + 1] for i in range(6))
    bytes_accessed = (
        int(xp.size) * xp.dtype.itemsize
        + Bp * padded[-1] * jnp.dtype(x.dtype).itemsize
        + sum(int(a.size) * a.dtype.itemsize for a in flat)
    )
    cost = pl.CostEstimate(
        flops=flops,
        transcendentals=2 * Bp * padded[-1],   # sigmoid ~ exp + reciprocal on the EUP
        bytes_accessed=bytes_accessed,
    )

    out_padded = pl.pallas_call(
        _make_kernel(compute_dtype),
        out_shape=jax.ShapeDtypeStruct((Bp, padded[-1]), x.dtype),
        grid=grid,
        in_specs=in_specs,
        out_specs=out_specs,
        compiler_params=pltpu.CompilerParams(
            dimension_semantics=("parallel",),
            vmem_limit_bytes=vmem_limit_bytes,
        ),
        cost_estimate=cost,
    )(xp, *flat)

    # Drop padded batch rows and padded (sigmoid(0)=0.5) output columns.
    return out_padded[:B, :input_dim]


def init_params(key, input_dim, encoding_dim):
    """Deterministic init mimicking nn.Linear (uniform +/- 1/sqrt(fan_in)).
    Weights stored pre-transposed as [in, out]; biases as [1, out]."""
    dims = [
        (input_dim, encoding_dim * 3),
        (encoding_dim * 3, encoding_dim * 2),
        (encoding_dim * 2, encoding_dim),
        (encoding_dim, input_dim * 2),
        (input_dim * 2, input_dim * 3),
        (input_dim * 3, input_dim),
    ]
    params = []
    for i, (fan_in, fan_out) in enumerate(dims):
        kw, kb = jax.random.split(jax.random.fold_in(key, i))
        bound = 1.0 / jnp.sqrt(fan_in)
        w = jax.random.uniform(kw, (fan_in, fan_out), jnp.float32, -bound, bound)
        b = jax.random.uniform(kb, (1, fan_out), jnp.float32, -bound, bound)
        params.append((w, b))
    return params


def reference_forward(x, params):
    h = x
    for i, (w, b) in enumerate(params):
        h = h @ w + b
        h = jax.nn.sigmoid(h) if i == len(params) - 1 else jnp.maximum(h, 0.0)
    return h


if __name__ == "__main__":
    key = jax.random.PRNGKey(0)
    batch, input_dim, encoding_dim = 256, 64, 32

    kx, kp = jax.random.split(key)
    x = jax.random.normal(kx, (batch, input_dim), jnp.float32)
    params = init_params(kp, input_dim, encoding_dim)
    ref = reference_forward(x, params)

    # f32 path: default tile_b=256 auto-splits the 256-row batch into a 2-step 128-row grid
    # (pipelined activation DMAs; both TCs used on v7x). Tight check vs the reference.
    out_f32 = jax.block_until_ready(autoencoder_forward(x, params))
    assert out_f32.shape == (batch, input_dim)
    assert jnp.allclose(out_f32, ref, atol=1e-5, rtol=1e-5), "f32 path mismatch vs reference"

    # bf16 fast path (v5e/v6e/v7x MXU-native): bf16 weights + input + intermediates,
    # f32 accumulation. Relaxed tolerance for expected bf16 rounding (not a bug).
    out_bf16 = jax.block_until_ready(
        autoencoder_forward(x, params, weight_dtype=jnp.bfloat16))
    assert out_bf16.shape == (batch, input_dim)
    assert jnp.allclose(out_bf16, ref, atol=5e-2, rtol=5e-2), "bf16 path mismatch vs reference"

    print("KERNEL_OK")
</pallas_src>

<mosaic_0001>
module attributes {stable_mosaic.version = 11 : i64} {
  func.func @autoencoder_kernel(%arg0: i32, %arg1: memref<128x128xf32, #tpu.memory_space<vmem>>, %arg2: memref<128x128xf32, #tpu.memory_space<vmem>>, %arg3: memref<1x128xf32, #tpu.memory_space<vmem>>, %arg4: memref<128x128xf32, #tpu.memory_space<vmem>>, %arg5: memref<1x128xf32, #tpu.memory_space<vmem>>, %arg6: memref<128x128xf32, #tpu.memory_space<vmem>>, %arg7: memref<1x128xf32, #tpu.memory_space<vmem>>, %arg8: memref<128x128xf32, #tpu.memory_space<vmem>>, %arg9: memref<1x128xf32, #tpu.memory_space<vmem>>, %arg10: memref<128x256xf32, #tpu.memory_space<vmem>>, %arg11: memref<1x256xf32, #tpu.memory_space<vmem>>, %arg12: memref<256x128xf32, #tpu.memory_space<vmem>>, %arg13: memref<1x128xf32, #tpu.memory_space<vmem>>, %arg14: memref<128x128xf32, #tpu.memory_space<vmem>>) attributes {dimension_semantics = [#tpu.dimension_semantics<parallel>], iteration_bounds = array<i64: 2>, scalar_prefetch = 0 : i64, scratch_operands = 0 : i64, tpu.core_type = #tpu.core_type<tc>, window_params = [{transform_indices = @transform_0, window_bounds = array<i64: 128, 128>}, {pipeline_mode = #tpu.pipeline_mode<synchronous>, transform_indices = @transform_1, window_bounds = array<i64: 128, 128>}, {pipeline_mode = #tpu.pipeline_mode<synchronous>, transform_indices = @transform_2, window_bounds = array<i64: 1, 128>}, {pipeline_mode = #tpu.pipeline_mode<synchronous>, transform_indices = @transform_3, window_bounds = array<i64: 128, 128>}, {pipeline_mode = #tpu.pipeline_mode<synchronous>, transform_indices = @transform_4, window_bounds = array<i64: 1, 128>}, {pipeline_mode = #tpu.pipeline_mode<synchronous>, transform_indices = @transform_5, window_bounds = array<i64: 128, 128>}, {pipeline_mode = #tpu.pipeline_mode<synchronous>, transform_indices = @transform_6, window_bounds = array<i64: 1, 128>}, {pipeline_mode = #tpu.pipeline_mode<synchronous>, transform_indices = @transform_7, window_bounds = array<i64: 128, 128>}, {pipeline_mode = #tpu.pipeline_mode<synchronous>, transform_indices = @transform_8, window_bounds = array<i64: 1, 128>}, {pipeline_mode = #tpu.pipeline_mode<synchronous>, transform_indices = @transform_9, window_bounds = array<i64: 128, 256>}, {pipeline_mode = #tpu.pipeline_mode<synchronous>, transform_indices = @transform_10, window_bounds = array<i64: 1, 256>}, {pipeline_mode = #tpu.pipeline_mode<synchronous>, transform_indices = @transform_11, window_bounds = array<i64: 256, 128>}, {pipeline_mode = #tpu.pipeline_mode<synchronous>, transform_indices = @transform_12, window_bounds = array<i64: 1, 128>}, {transform_indices = @transform_13, window_bounds = array<i64: 128, 128>}]} {
    %c0 = arith.constant 0 : index
    %c0_0 = arith.constant 0 : index
    %0 = vector.load %arg1[%c0, %c0_0] : memref<128x128xf32, #tpu.memory_space<vmem>>, vector<128x128xf32>
    %c0_1 = arith.constant 0 : index
    %c0_2 = arith.constant 0 : index
    %1 = vector.load %arg2[%c0_1, %c0_2] : memref<128x128xf32, #tpu.memory_space<vmem>>, vector<128x128xf32>
    %cst = arith.constant dense<0.000000e+00> : vector<128x128xf32>
    %2 = tpu.matmul %0, %1, %cst {dimension_numbers = #tpu.dot_dimension_numbers<[1], [0], [0], [1], [0, 0, 1, 1], [], []>} : vector<128x128xf32>, vector<128x128xf32>, vector<128x128xf32> -> vector<128x128xf32>
    %c0_3 = arith.constant 0 : index
    %c0_4 = arith.constant 0 : index
    %3 = vector.load %arg3[%c0_3, %c0_4] : memref<1x128xf32, #tpu.memory_space<vmem>>, vector<1x128xf32>
    %4 = vector.broadcast %3 : vector<1x128xf32> to vector<128x128xf32>
    %5 = arith.addf %2, %4 : vector<128x128xf32>
    %cst_5 = arith.constant 0.000000e+00 : f32
    %6 = vector.broadcast %cst_5 : f32 to vector<128x128xf32>
    %7 = arith.maximumf %5, %6 : vector<128x128xf32>
    %c0_6 = arith.constant 0 : index
    %c0_7 = arith.constant 0 : index
    %8 = vector.load %arg4[%c0_6, %c0_7] : memref<128x128xf32, #tpu.memory_space<vmem>>, vector<128x128xf32>
    %cst_8 = arith.constant dense<0.000000e+00> : vector<128x128xf32>
    %9 = tpu.matmul %7, %8, %cst_8 {dimension_numbers = #tpu.dot_dimension_numbers<[1], [0], [0], [1], [0, 0, 1, 1], [], []>} : vector<128x128xf32>, vector<128x128xf32>, vector<128x128xf32> -> vector<128x128xf32>
    %c0_9 = arith.constant 0 : index
    %c0_10 = arith.constant 0 : index
    %10 = vector.load %arg5[%c0_9, %c0_10] : memref<1x128xf32, #tpu.memory_space<vmem>>, vector<1x128xf32>
    %11 = vector.broadcast %10 : vector<1x128xf32> to vector<128x128xf32>
    %12 = arith.addf %9, %11 : vector<128x128xf32>
    %cst_11 = arith.constant 0.000000e+00 : f32
    %13 = vector.broadcast %cst_11 : f32 to vector<128x128xf32>
    %14 = arith.maximumf %12, %13 : vector<128x128xf32>
    %c0_12 = arith.constant 0 : index
    %c0_13 = arith.constant 0 : index
    %15 = vector.load %arg6[%c0_12, %c0_13] : memref<128x128xf32, #tpu.memory_space<vmem>>, vector<128x128xf32>
    %cst_14 = arith.constant dense<0.000000e+00> : vector<128x128xf32>
    %16 = tpu.matmul %14, %15, %cst_14 {dimension_numbers = #tpu.dot_dimension_numbers<[1], [0], [0], [1], [0, 0, 1, 1], [], []>} : vector<128x128xf32>, vector<128x128xf32>, vector<128x128xf32> -> vector<128x128xf32>
    %c0_15 = arith.constant 0 : index
    %c0_16 = arith.constant 0 : index
    %17 = vector.load %arg7[%c0_15, %c0_16] : memref<1x128xf32, #tpu.memory_space<vmem>>, vector<1x128xf32>
    %18 = vector.broadcast %17 : vector<1x128xf32> to vector<128x128xf32>
    %19 = arith.addf %16, %18 : vector<128x128xf32>
    %cst_17 = arith.constant 0.000000e+00 : f32
    %20 = vector.broadcast %cst_17 : f32 to vector<128x128xf32>
    %21 = arith.maximumf %19, %20 : vector<128x128xf32>
    %c0_18 = arith.constant 0 : index
    %c0_19 = arith.constant 0 : index
    %22 = vector.load %arg8[%c0_18, %c0_19] : memref<128x128xf32, #tpu.memory_space<vmem>>, vector<128x128xf32>
    %cst_20 = arith.constant dense<0.000000e+00> : vector<128x128xf32>
    %23 = tpu.matmul %21, %22, %cst_20 {dimension_numbers = #tpu.dot_dimension_numbers<[1], [0], [0], [1], [0, 0, 1, 1], [], []>} : vector<128x128xf32>, vector<128x128xf32>, vector<128x128xf32> -> vector<128x128xf32>
    %c0_21 = arith.constant 0 : index
    %c0_22 = arith.constant 0 : index
    %24 = vector.load %arg9[%c0_21, %c0_22] : memref<1x128xf32, #tpu.memory_space<vmem>>, vector<1x128xf32>
    %25 = vector.broadcast %24 : vector<1x128xf32> to vector<128x128xf32>
    %26 = arith.addf %23, %25 : vector<128x128xf32>
    %cst_23 = arith.constant 0.000000e+00 : f32
    %27 = vector.broadcast %cst_23 : f32 to vector<128x128xf32>
    %28 = arith.maximumf %26, %27 : vector<128x128xf32>
    %c0_24 = arith.constant 0 : index
    %c0_25 = arith.constant 0 : index
    %29 = vector.load %arg10[%c0_24, %c0_25] : memref<128x256xf32, #tpu.memory_space<vmem>>, vector<128x256xf32>
    %cst_26 = arith.constant dense<0.000000e+00> : vector<128x256xf32>
    %30 = tpu.matmul %28, %29, %cst_26 {dimension_numbers = #tpu.dot_dimension_numbers<[1], [0], [0], [1], [0, 0, 1, 1], [], []>} : vector<128x128xf32>, vector<128x256xf32>, vector<128x256xf32> -> vector<128x256xf32>
    %c0_27 = arith.constant 0 : index
    %c0_28 = arith.constant 0 : index
    %31 = vector.load %arg11[%c0_27, %c0_28] : memref<1x256xf32, #tpu.memory_space<vmem>>, vector<1x256xf32>
    %32 = vector.broadcast %31 : vector<1x256xf32> to vector<128x256xf32>
    %33 = arith.addf %30, %32 : vector<128x256xf32>
    %cst_29 = arith.constant 0.000000e+00 : f32
    %34 = vector.broadcast %cst_29 : f32 to vector<128x256xf32>
    %35 = arith.maximumf %33, %34 : vector<128x256xf32>
    %c0_30 = arith.constant 0 : index
    %c0_31 = arith.constant 0 : index
    %36 = vector.load %arg12[%c0_30, %c0_31] : memref<256x128xf32, #tpu.memory_space<vmem>>, vector<256x128xf32>
    %cst_32 = arith.constant dense<0.000000e+00> : vector<128x128xf32>
    %37 = tpu.matmul %35, %36, %cst_32 {dimension_numbers = #tpu.dot_dimension_numbers<[1], [0], [0], [1], [0, 0, 1, 1], [], []>} : vector<128x256xf32>, vector<256x128xf32>, vector<128x128xf32> -> vector<128x128xf32>
    %c0_33 = arith.constant 0 : index
    %c0_34 = arith.constant 0 : index
    %38 = vector.load %arg13[%c0_33, %c0_34] : memref<1x128xf32, #tpu.memory_space<vmem>>, vector<1x128xf32>
    %39 = vector.broadcast %38 : vector<1x128xf32> to vector<128x128xf32>
    %40 = arith.addf %37, %39 : vector<128x128xf32>
    %41 = arith.negf %40 : vector<128x128xf32>
    %42 = math.exp %41 : vector<128x128xf32>
    %cst_35 = arith.constant 1.000000e+00 : f32
    %43 = vector.broadcast %cst_35 : f32 to vector<128x128xf32>
    %44 = arith.addf %43, %42 : vector<128x128xf32>
    %45 = arith.divf %43, %44 : vector<128x128xf32>
    %c0_36 = arith.constant 0 : index
    %c0_37 = arith.constant 0 : index
    %46 = vector.load %arg14[%c0_36, %c0_37] : memref<128x128xf32, #tpu.memory_space<vmem>>, vector<128x128xf32>
    tpu.vector_store %arg14[%c0_36, %c0_37], %45 {strides = array<i32>} : memref<128x128xf32, #tpu.memory_space<vmem>>, vector<128x128xf32>,
    return
  }
  func.func @transform_0(%arg0: i32) -> (i32, i32) {
    %c0_i32 = arith.constant 0 : i32
    %c0_i32_0 = arith.constant 0 : i32
    return %arg0, %c0_i32 : i32, i32
  }
  func.func @transform_1(%arg0: i32) -> (i32, i32) {
    %c0_i32 = arith.constant 0 : i32
    %c0_i32_0 = arith.constant 0 : i32
    %c0_i32_1 = arith.constant 0 : i32
    return %c0_i32, %c0_i32_0 : i32, i32
  }
  func.func @transform_2(%arg0: i32) -> (i32, i32) {
    %c0_i32 = arith.constant 0 : i32
    %c0_i32_0 = arith.constant 0 : i32
    %c0_i32_1 = arith.constant 0 : i32
    return %c0_i32, %c0_i32_0 : i32, i32
  }
  func.func @transform_3(%arg0: i32) -> (i32, i32) {
    %c0_i32 = arith.constant 0 : i32
    %c0_i32_0 = arith.constant 0 : i32
    %c0_i32_1 = arith.constant 0 : i32
    return %c0_i32, %c0_i32_0 : i32, i32
  }
  func.func @transform_4(%arg0: i32) -> (i32, i32) {
    %c0_i32 = arith.constant 0 : i32
    %c0_i32_0 = arith.constant 0 : i32
    %c0_i32_1 = arith.constant 0 : i32
    return %c0_i32, %c0_i32_0 : i32, i32
  }
  func.func @transform_5(%arg0: i32) -> (i32, i32) {
    %c0_i32 = arith.constant 0 : i32
    %c0_i32_0 = arith.constant 0 : i32
    %c0_i32_1 = arith.constant 0 : i32
    return %c0_i32, %c0_i32_0 : i32, i32
  }
  func.func @transform_6(%arg0: i32) -> (i32, i32) {
    %c0_i32 = arith.constant 0 : i32
    %c0_i32_0 = arith.constant 0 : i32
    %c0_i32_1 = arith.constant 0 : i32
    return %c0_i32, %c0_i32_0 : i32, i32
  }
  func.func @transform_7(%arg0: i32) -> (i32, i32) {
    %c0_i32 = arith.constant 0 : i32
    %c0_i32_0 = arith.constant 0 : i32
    %c0_i32_1 = arith.constant 0 : i32
    return %c0_i32, %c0_i32_0 : i32, i32
  }
  func.func @transform_8(%arg0: i32) -> (i32, i32) {
    %c0_i32 = arith.constant 0 : i32
    %c0_i32_0 = arith.constant 0 : i32
    %c0_i32_1 = arith.constant 0 : i32
    return %c0_i32, %c0_i32_0 : i32, i32
  }
  func.func @transform_9(%arg0: i32) -> (i32, i32) {
    %c0_i32 = arith.constant 0 : i32
    %c0_i32_0 = arith.constant 0 : i32
    %c0_i32_1 = arith.constant 0 : i32
    return %c0_i32, %c0_i32_0 : i32, i32
  }
  func.func @transform_10(%arg0: i32) -> (i32, i32) {
    %c0_i32 = arith.constant 0 : i32
    %c0_i32_0 = arith.constant 0 : i32
    %c0_i32_1 = arith.constant 0 : i32
    return %c0_i32, %c0_i32_0 : i32, i32
  }
  func.func @transform_11(%arg0: i32) -> (i32, i32) {
    %c0_i32 = arith.constant 0 : i32
    %c0_i32_0 = arith.constant 0 : i32
    %c0_i32_1 = arith.constant 0 : i32
    return %c0_i32, %c0_i32_0 : i32, i32
  }
  func.func @transform_12(%arg0: i32) -> (i32, i32) {
    %c0_i32 = arith.constant 0 : i32
    %c0_i32_0 = arith.constant 0 : i32
    %c0_i32_1 = arith.constant 0 : i32
    return %c0_i32, %c0_i32_0 : i32, i32
  }
  func.func @transform_13(%arg0: i32) -> (i32, i32) {
    %c0_i32 = arith.constant 0 : i32
    %c0_i32_0 = arith.constant 0 : i32
    return %arg0, %c0_i32 : i32, i32
  }
}

</mosaic_0001>

<llo_original>
// kernel: tpu_custom_call.1
$region0: #{tpu_custom_call.1}
  #allocation0 [shape = 'u32[]', space=smem, size = 0x4, offset = 0x4, fixed_abs, tag = 'smem constant byte address 0x4 - core index']
  #allocation1 [shape = 'u32[144,128]{1,0:T(1,128)}', space=vmem, size = 0x12000, scoped, tag = 'internal scratch']
  %s0 = inlined_call_operand.hbm [shape: f32[256,128], index: 0, kind: input, shape index: {}]
  %s1 = inlined_call_operand.hbm [shape: f32[128,128], index: 1, kind: input, shape index: {}]
  %s2 = inlined_call_operand.vmem [shape: f32[1,128], index: 2, kind: input, shape index: {}]
  %s3 = inlined_call_operand.hbm [shape: f32[128,128], index: 3, kind: input, shape index: {}]
  %s4 = inlined_call_operand.vmem [shape: f32[1,128], index: 4, kind: input, shape index: {}]
  %s5 = inlined_call_operand.hbm [shape: f32[128,128], index: 5, kind: input, shape index: {}]
  %s6 = inlined_call_operand.vmem [shape: f32[1,128], index: 6, kind: input, shape index: {}]
  %s7 = inlined_call_operand.hbm [shape: f32[128,128], index: 7, kind: input, shape index: {}]
  %s8 = inlined_call_operand.vmem [shape: f32[1,128], index: 8, kind: input, shape index: {}]
  %s9 = inlined_call_operand.hbm [shape: f32[128,256], index: 9, kind: input, shape index: {}]
  %s10 = inlined_call_operand.vmem [shape: f32[1,256], index: 10, kind: input, shape index: {}]
  %s11 = inlined_call_operand.hbm [shape: f32[256,128], index: 11, kind: input, shape index: {}]
  %s12 = inlined_call_operand.vmem [shape: f32[1,128], index: 12, kind: input, shape index: {}]
  %s13 = inlined_call_operand.hbm [shape: f32[256,128], index: 13, kind: output, shape index: {}]
  %s14 = sld [smem:[#allocation0]]
  $region113: #{tpu_custom_call.1} parent=0
    _
  %s16 = ssub.s32 1, %s14
  %s17 = scalar_select 0, %s16, %s14
  $region1: #{tpu_custom_call.1} parent=0
    #allocation2 [shape = 'u8[131072]{0}', space=vmem, size = 0x20000, scoped, tag = 'input window, operand 0']
    #allocation3 [shape = 's32[2]{0}', space=sflag, size = 0x8, scoped, tag = 'scoped memory for tpu_custom_call.1']
    #allocation4 [shape = 's32[2]{0}', space=sflag, size = 0x8, scoped, tag = 'scoped memory for tpu_custom_call.1']
    #allocation5 [shape = 'u8[65536]{0}', space=vmem, size = 0x10000, scoped, tag = 'input window, operand 1, single buffered']
    #allocation6 [shape = 's32[1]{0}', space=sflag, size = 0x4, scoped, tag = 'scoped memory for tpu_custom_call.1']
    #allocation7 [shape = 'u8[65536]{0}', space=vmem, size = 0x10000, scoped, tag = 'input window, operand 3, single buffered']
    #allocation8 [shape = 'u8[65536]{0}', space=vmem, size = 0x10000, scoped, tag = 'input window, operand 5, single buffered']
    #allocation9 [shape = 's32[1]{0}', space=sflag, size = 0x4, scoped, tag = 'scoped memory for tpu_custom_call.1']
    #allocation10 [shape = 'u8[65536]{0}', space=vmem, size = 0x10000, scoped, tag = 'input window, operand 7, single buffered']
    #allocation11 [shape = 'u8[131072]{0}', space=vmem, size = 0x20000, scoped, tag = 'input window, operand 9, single buffered']
    #allocation12 [shape = 's32[1]{0}', space=sflag, size = 0x4, scoped, tag = 'scoped memory for tpu_custom_call.1']
    #allocation13 [shape = 'u8[131072]{0}', space=vmem, size = 0x20000, scoped, tag = 'input window, operand 11, single buffered']
    #allocation14 [shape = 'u8[131072]{0}', space=vmem, size = 0x20000, scoped, tag = 'output window, operand 0']
    %18 = vsyncpa [#allocation3], 0
    %s19 = scalar_lea.sflag [#allocation3], 1
    %20 = vsyncpa %s19, 0
    %21 = vsyncpa [#allocation6], 0
    %22 = vsyncpa [#allocation9], 0
    %23 = vsyncpa [#allocation12], 0
    %24 = vsyncpa [#allocation4], 0
    %s25 = scalar_lea.sflag [#allocation4], 1
    %26 = vsyncpa %s25, 0
    loop: start=0, step=1, limit=4
    $region2: #{tpu_custom_call.1} parent=1 // loop_pre_header
      _
    $region3: #{tpu_custom_call.1} parent=1 // loop_header
      %s28 = sphi 0, %s32
      %p29 = scmp.ge.s32.totalorder %s28, 4
      %s38 = sphi 0, %s40
      %s41 = sphi 0, %s38
      %s42 = sphi 0, %s41
      %s58 = sphi 0, %s42
      %s62 = sphi 0, %s62
      %s64 = sphi 0, %s62
      %s65 = sphi 0, %s64
      %s79 = sphi 0, %s65
      %s83 = sphi 0, %s83
      %s85 = sphi 0, %s83
      %s86 = sphi 0, %s85
      %s100 = sphi 0, %s86
      %s104 = sphi 0, %s104
      %s106 = sphi 0, %s104
      %s107 = sphi 0, %s106
      %s121 = sphi 0, %s107
      %s125 = sphi 0, %s125
      %s127 = sphi 0, %s125
      %s128 = sphi 0, %s127
      %s142 = sphi 0, %s128
      %s146 = sphi 0, %s146
      %s148 = sphi 0, %s146
      %s149 = sphi 0, %s148
      %s163 = sphi 0, %s149
      %s167 = sphi 0, %s167
      %s169 = sphi 0, %s167
      %s170 = sphi 0, %s169
      %s184 = sphi 0, %s170
      %s188 = sphi 0, %s188
      %s190 = sphi 0, %s188
      %s191 = sphi 0, %s190
      %s205 = sphi 0, %s191
      %s209 = sphi 0, %s209
      %s211 = sphi 0, %s209
      %s212 = sphi 0, %s211
      %s226 = sphi 0, %s212
      %s230 = sphi 0, %s230
      %s232 = sphi 0, %s230
      %s233 = sphi 0, %s232
      %s247 = sphi 0, %s233
      %s251 = sphi 0, %s251
      %s253 = sphi 0, %s251
      %s254 = sphi 0, %s253
      %s268 = sphi 0, %s254
      %s272 = sphi 0, %s272
      %s274 = sphi 0, %s272
      %s275 = sphi 0, %s274
      %s289 = sphi 0, %s275
      %s293 = sphi 0, %s293
      %s295 = sphi 0, %s293
      %s296 = sphi 0, %s295
      %s310 = sphi 0, %s296
      %s316 = sphi 0, %s318
      %s319 = sphi 0, %s316
      %s320 = sphi 0, %s319
      %s336 = sphi 0, %s320
    $region4: #{tpu_custom_call.1} parent=1 // loop_header_branch
      %31 = sbr.rel (%p29) target = $region8
    $region5: #{tpu_custom_call.1} parent=1 // loop_body
      %s33 = ssub.s32 %s28, 1
      %s34 = ssub.s32 %s28, 2
      %s35 = sadd.s32 %s28, 1
      %s36 = ssub.s32 %s28, %s35
      %p37 = scmp.eq.s32.totalorder %s36, 0
      %s39 = sadd.s32 %s38, 1
      %s40 = scalar_select %p37, %s38, %s39
      %p43 = pneg %p37
      %p44 = scmp.eq.s32.totalorder %s28, 1
      %p45 = por %p43, %p44
      %p46 = scmp.ne.s32.totalorder %s38, %s41
      %p47 = scmp.eq.s32.totalorder %s28, 0
      %p48 = por %p46, %p47
      %p49 = scmp.ne.s32.totalorder %s38, %s41
      %p50 = scmp.eq.s32.totalorder %s33, 1
      %p51 = por %p49, %p50
      %p52 = scmp.ne.s32.totalorder %s41, %s42
      %p53 = scmp.eq.s32.totalorder %s33, 0
      %p54 = por %p52, %p53
      %p55 = scmp.ne.s32.totalorder %s41, %s42
      %p56 = scmp.eq.s32.totalorder %s34, 1
      %p57 = por %p55, %p56
      %p59 = scmp.ne.s32.totalorder %s42, %s58
      %p60 = scmp.eq.s32.totalorder %s34, 0
      %p61 = por %p59, %p60
      %s63 = sadd.s32 %s62, 1
      %p66 = scmp.eq.s32.totalorder %s28, 1
      %p67 = scmp.ne.s32.totalorder %s62, %s64
      %p68 = scmp.eq.s32.totalorder %s28, 0
      %p69 = por %p67, %p68
      %p70 = scmp.ne.s32.totalorder %s62, %s64
      %p71 = scmp.eq.s32.totalorder %s33, 1
      %p72 = por %p70, %p71
      %p73 = scmp.ne.s32.totalorder %s64, %s65
      %p74 = scmp.eq.s32.totalorder %s33, 0
      %p75 = por %p73, %p74
      %p76 = scmp.ne.s32.totalorder %s64, %s65
      %p77 = scmp.eq.s32.totalorder %s34, 1
      %p78 = por %p76, %p77
      %p80 = scmp.ne.s32.totalorder %s65, %s79
      %p81 = scmp.eq.s32.totalorder %s34, 0
      %p82 = por %p80, %p81
      %s84 = sadd.s32 %s83, 1
      %p87 = scmp.eq.s32.totalorder %s28, 1
      %p88 = scmp.ne.s32.totalorder %s83, %s85
      %p89 = scmp.eq.s32.totalorder %s28, 0
      %p90 = por %p88, %p89
      %p91 = scmp.ne.s32.totalorder %s83, %s85
      %p92 = scmp.eq.s32.totalorder %s33, 1
      %p93 = por %p91, %p92
      %p94 = scmp.ne.s32.totalorder %s85, %s86
      %p95 = scmp.eq.s32.totalorder %s33, 0
      %p96 = por %p94, %p95
      %p97 = scmp.ne.s32.totalorder %s85, %s86
      %p98 = scmp.eq.s32.totalorder %s34, 1
      %p99 = por %p97, %p98
      %p101 = scmp.ne.s32.totalorder %s86, %s100
      %p102 = scmp.eq.s32.totalorder %s34, 0
      %p103 = por %p101, %p102
      %s105 = sadd.s32 %s104, 1
      %p108 = scmp.eq.s32.totalorder %s28, 1
      %p109 = scmp.ne.s32.totalorder %s104, %s106
      %p110 = scmp.eq.s32.totalorder %s28, 0
      %p111 = por %p109, %p110
      %p112 = scmp.ne.s32.totalorder %s104, %s106
      %p113 = scmp.eq.s32.totalorder %s33, 1
      %p114 = por %p112, %p113
      %p115 = scmp.ne.s32.totalorder %s106, %s107
      %p116 = scmp.eq.s32.totalorder %s33, 0
      %p117 = por %p115, %p116
      %p118 = scmp.ne.s32.totalorder %s106, %s107
      %p119 = scmp.eq.s32.totalorder %s34, 1
      %p120 = por %p118, %p119
      %p122 = scmp.ne.s32.totalorder %s107, %s121
      %p123 = scmp.eq.s32.totalorder %s34, 0
      %p124 = por %p122, %p123
      %s126 = sadd.s32 %s125, 1
      %p129 = scmp.eq.s32.totalorder %s28, 1
      %p130 = scmp.ne.s32.totalorder %s125, %s127
      %p131 = scmp.eq.s32.totalorder %s28, 0
      %p132 = por %p130, %p131
      %p133 = scmp.ne.s32.totalorder %s125, %s127
      %p134 = scmp.eq.s32.totalorder %s33, 1
      %p135 = por %p133, %p134
      %p136 = scmp.ne.s32.totalorder %s127, %s128
      %p137 = scmp.eq.s32.totalorder %s33, 0
      %p138 = por %p136, %p137
      %p139 = scmp.ne.s32.totalorder %s127, %s128
      %p140 = scmp.eq.s32.totalorder %s34, 1
      %p141 = por %p139, %p140
      %p143 = scmp.ne.s32.totalorder %s128, %s142
      %p144 = scmp.eq.s32.totalorder %s34, 0
      %p145 = por %p143, %p144
      %s147 = sadd.s32 %s146, 1
      %p150 = scmp.eq.s32.totalorder %s28, 1
      %p151 = scmp.ne.s32.totalorder %s146, %s148
      %p152 = scmp.eq.s32.totalorder %s28, 0
      %p153 = por %p151, %p152
      %p154 = scmp.ne.s32.totalorder %s146, %s148
      %p155 = scmp.eq.s32.totalorder %s33, 1
      %p156 = por %p154, %p155
      %p157 = scmp.ne.s32.totalorder %s148, %s149
      %p158 = scmp.eq.s32.totalorder %s33, 0
      %p159 = por %p157, %p158
      %p160 = scmp.ne.s32.totalorder %s148, %s149
      %p161 = scmp.eq.s32.totalorder %s34, 1
      %p162 = por %p160, %p161
      %p164 = scmp.ne.s32.totalorder %s149, %s163
      %p165 = scmp.eq.s32.totalorder %s34, 0
      %p166 = por %p164, %p165
      %s168 = sadd.s32 %s167, 1
      %p171 = scmp.eq.s32.totalorder %s28, 1
      %p172 = scmp.ne.s32.totalorder %s167, %s169
      %p173 = scmp.eq.s32.totalorder %s28, 0
      %p174 = por %p172, %p173
      %p175 = scmp.ne.s32.totalorder %s167, %s169
      %p176 = scmp.eq.s32.totalorder %s33, 1
      %p177 = por %p175, %p176
      %p178 = scmp.ne.s32.totalorder %s169, %s170
      %p179 = scmp.eq.s32.totalorder %s33, 0
      %p180 = por %p178, %p179
      %p181 = scmp.ne.s32.totalorder %s169, %s170
      %p182 = scmp.eq.s32.totalorder %s34, 1
      %p183 = por %p181, %p182
      %p185 = scmp.ne.s32.totalorder %s170, %s184
      %p186 = scmp.eq.s32.totalorder %s34, 0
      %p187 = por %p185, %p186
      %s189 = sadd.s32 %s188, 1
      %p192 = scmp.eq.s32.totalorder %s28, 1
      %p193 = scmp.ne.s32.totalorder %s188, %s190
      %p194 = scmp.eq.s32.totalorder %s28, 0
      %p195 = por %p193, %p194
      %p196 = scmp.ne.s32.totalorder %s188, %s190
      %p197 = scmp.eq.s32.totalorder %s33, 1
      %p198 = por %p196, %p197
      %p199 = scmp.ne.s32.totalorder %s190, %s191
      %p200 = scmp.eq.s32.totalorder %s33, 0
      %p201 = por %p199, %p200
      %p202 = scmp.ne.s32.totalorder %s190, %s191
      %p203 = scmp.eq.s32.totalorder %s34, 1
      %p204 = por %p202, %p203
      %p206 = scmp.ne.s32.totalorder %s191, %s205
      %p207 = scmp.eq.s32.totalorder %s34, 0
      %p208 = por %p206, %p207
      %s210 = sadd.s32 %s209, 1
      %p213 = scmp.eq.s32.totalorder %s28, 1
      %p214 = scmp.ne.s32.totalorder %s209, %s211
      %p215 = scmp.eq.s32.totalorder %s28, 0
      %p216 = por %p214, %p215
      %p217 = scmp.ne.s32.totalorder %s209, %s211
      %p218 = scmp.eq.s32.totalorder %s33, 1
      %p219 = por %p217, %p218
      %p220 = scmp.ne.s32.totalorder %s211, %s212
      %p221 = scmp.eq.s32.totalorder %s33, 0
      %p222 = por %p220, %p221
      %p223 = scmp.ne.s32.totalorder %s211, %s212
      %p224 = scmp.eq.s32.totalorder %s34, 1
      %p225 = por %p223, %p224
      %p227 = scmp.ne.s32.totalorder %s212, %s226
      %p228 = scmp.eq.s32.totalorder %s34, 0
      %p229 = por %p227, %p228
      %s231 = sadd.s32 %s230, 1
      %p234 = scmp.eq.s32.totalorder %s28, 1
      %p235 = scmp.ne.s32.totalorder %s230, %s232
      %p236 = scmp.eq.s32.totalorder %s28, 0
      %p237 = por %p235, %p236
      %p238 = scmp.ne.s32.totalorder %s230, %s232
      %p239 = scmp.eq.s32.totalorder %s33, 1
      %p240 = por %p238, %p239
      %p241 = scmp.ne.s32.totalorder %s232, %s233
      %p242 = scmp.eq.s32.totalorder %s33, 0
      %p243 = por %p241, %p242
      %p244 = scmp.ne.s32.totalorder %s232, %s233
      %p245 = scmp.eq.s32.totalorder %s34, 1
      %p246 = por %p244, %p245
      %p248 = scmp.ne.s32.totalorder %s233, %s247
      %p249 = scmp.eq.s32.totalorder %s34, 0
      %p250 = por %p248, %p249
      %s252 = sadd.s32 %s251, 1
      %p255 = scmp.eq.s32.totalorder %s28, 1
      %p256 = scmp.ne.s32.totalorder %s251, %s253
      %p257 = scmp.eq.s32.totalorder %s28, 0
      %p258 = por %p256, %p257
      %p259 = scmp.ne.s32.totalorder %s251, %s253
      %p260 = scmp.eq.s32.totalorder %s33, 1
      %p261 = por %p259, %p260
      %p262 = scmp.ne.s32.totalorder %s253, %s254
      %p263 = scmp.eq.s32.totalorder %s33, 0
      %p264 = por %p262, %p263
      %p265 = scmp.ne.s32.totalorder %s253, %s254
      %p266 = scmp.eq.s32.totalorder %s34, 1
      %p267 = por %p265, %p266
      %p269 = scmp.ne.s32.totalorder %s254, %s268
      %p270 = scmp.eq.s32.totalorder %s34, 0
      %p271 = por %p269, %p270
      %s273 = sadd.s32 %s272, 1
      %p276 = scmp.eq.s32.totalorder %s28, 1
      %p277 = scmp.ne.s32.totalorder %s272, %s274
      %p278 = scmp.eq.s32.totalorder %s28, 0
      %p279 = por %p277, %p278
      %p280 = scmp.ne.s32.totalorder %s272, %s274
      %p281 = scmp.eq.s32.totalorder %s33, 1
      %p282 = por %p280, %p281
      %p283 = scmp.ne.s32.totalorder %s274, %s275
      %p284 = scmp.eq.s32.totalorder %s33, 0
      %p285 = por %p283, %p284
      %p286 = scmp.ne.s32.totalorder %s274, %s275
      %p287 = scmp.eq.s32.totalorder %s34, 1
      %p288 = por %p286, %p287
      %p290 = scmp.ne.s32.totalorder %s275, %s289
      %p291 = scmp.eq.s32.totalorder %s34, 0
      %p292 = por %p290, %p291
      %s294 = sadd.s32 %s293, 1
      %p297 = scmp.eq.s32.totalorder %s28, 1
      %p298 = scmp.ne.s32.totalorder %s293, %s295
      %p299 = scmp.eq.s32.totalorder %s28, 0
      %p300 = por %p298, %p299
      %p301 = scmp.ne.s32.totalorder %s293, %s295
      %p302 = scmp.eq.s32.totalorder %s33, 1
      %p303 = por %p301, %p302
      %p304 = scmp.ne.s32.totalorder %s295, %s296
      %p305 = scmp.eq.s32.totalorder %s33, 0
      %p306 = por %p304, %p305
      %p307 = scmp.ne.s32.totalorder %s295, %s296
      %p308 = scmp.eq.s32.totalorder %s34, 1
      %p309 = por %p307, %p308
      %p311 = scmp.ne.s32.totalorder %s296, %s310
      %p312 = scmp.eq.s32.totalorder %s34, 0
      %p313 = por %p311, %p312
      %s314 = ssub.s32 %s28, %s35
      %p315 = scmp.eq.s32.totalorder %s314, 0
      %s317 = sadd.s32 %s316, 1
      %s318 = scalar_select %p315, %s316, %s317
      %p321 = pneg %p315
      %p322 = scmp.eq.s32.totalorder %s28, 1
      %p323 = por %p321, %p322
      %p324 = scmp.ne.s32.totalorder %s316, %s319
      %p325 = scmp.eq.s32.totalorder %s28, 0
      %p326 = por %p324, %p325
      %p327 = scmp.ne.s32.totalorder %s316, %s319
      %p328 = scmp.eq.s32.totalorder %s33, 1
      %p329 = por %p327, %p328
      %p330 = scmp.ne.s32.totalorder %s319, %s320
      %p331 = scmp.eq.s32.totalorder %s33, 0
      %p332 = por %p330, %p331
      %p333 = scmp.ne.s32.totalorder %s319, %s320
      %p334 = scmp.eq.s32.totalorder %s34, 1
      %p335 = por %p333, %p334
      %p337 = scmp.ne.s32.totalorder %s320, %s336
      %p338 = scmp.eq.s32.totalorder %s34, 0
      %p339 = por %p337, %p338
      %p340 = scmp.le.s32.totalorder 1, %s28
      %p341 = scmp.lt.s32.totalorder %s28, 3
      %p342 = pnand %p340, %p341
      %p343 = pneg %p342
      // Predicated region
      $region9: #{tpu_custom_call.1} parent=5 // pred_check
        _
      $region10: #{tpu_custom_call.1} parent=5 // pred_check_branch
        %345 = sbr.rel (%p342) target = $region12
      $region11: #{tpu_custom_call.1} parent=5 // pred_region
        %s346 = ssub.s32 %s28, 1
        // Predicated region
        $region13: #{tpu_custom_call.1} parent=11 // pred_check
          %p347 = pneg %p75
        $region14: #{tpu_custom_call.1} parent=11 // pred_check_branch
          %349 = sbr.rel (%p347) target = $region16
        $region15: #{tpu_custom_call.1} parent=11 // pred_region
          %s351 = ssub.s32 2048, 2048
          %352 = vsyncadd [#allocation6], %s351
          %s353 = sshll.u32 [#allocation5], 4
          %s354 = int_to_ptr.vmem [resolvable:$true] %s353
          %359 = dma.hbm_to_vmem [thread:$0]  %s1, 2048, %s354, [#allocation6], 128, 128, 8
        $region16: #{tpu_custom_call.1} parent=11 // pred_fallthru
          _
        // Predicated region
        $region17: #{tpu_custom_call.1} parent=11 // pred_check
          %p360 = pneg %p96
        $region18: #{tpu_custom_call.1} parent=11 // pred_check_branch
          %362 = sbr.rel (%p360) target = $region20
        $region19: #{tpu_custom_call.1} parent=11 // pred_region
          _
        $region20: #{tpu_custom_call.1} parent=11 // pred_fallthru
          _
        // Predicated region
        $region21: #{tpu_custom_call.1} parent=11 // pred_check
          %p363 = pneg %p117
        $region22: #{tpu_custom_call.1} parent=11 // pred_check_branch
          %365 = sbr.rel (%p363) target = $region24
        $region23: #{tpu_custom_call.1} parent=11 // pred_region
          %s367 = ssub.s32 2048, 2048
          %368 = vsyncadd [#allocation6], %s367
          %s369 = sshll.u32 [#allocation7], 4
          %s370 = int_to_ptr.vmem [resolvable:$true] %s369
          %375 = dma.hbm_to_vmem [thread:$0]  %s3, 2048, %s370, [#allocation6], 128, 128, 8
        $region24: #{tpu_custom_call.1} parent=11 // pred_fallthru
          _
        // Predicated region
        $region25: #{tpu_custom_call.1} parent=11 // pred_check
          %p376 = pneg %p138
        $region26: #{tpu_custom_call.1} parent=11 // pred_check_branch
          %378 = sbr.rel (%p376) target = $region28
        $region27: #{tpu_custom_call.1} parent=11 // pred_region
          _
        $region28: #{tpu_custom_call.1} parent=11 // pred_fallthru
          _
        // Predicated region
        $region29: #{tpu_custom_call.1} parent=11 // pred_check
          %p379 = pneg %p159
        $region30: #{tpu_custom_call.1} parent=11 // pred_check_branch
          %381 = sbr.rel (%p379) target = $region32
        $region31: #{tpu_custom_call.1} parent=11 // pred_region
          %s383 = ssub.s32 2048, 2048
          %384 = vsyncadd [#allocation9], %s383
          %s385 = sshll.u32 [#allocation8], 4
          %s386 = int_to_ptr.vmem [resolvable:$true] %s385
          %391 = dma.hbm_to_vmem [thread:$0]  %s5, 2048, %s386, [#allocation9], 128, 128, 8
        $region32: #{tpu_custom_call.1} parent=11 // pred_fallthru
          _
        // Predicated region
        $region33: #{tpu_custom_call.1} parent=11 // pred_check
          %p392 = pneg %p180
        $region34: #{tpu_custom_call.1} parent=11 // pred_check_branch
          %394 = sbr.rel (%p392) target = $region36
        $region35: #{tpu_custom_call.1} parent=11 // pred_region
          _
        $region36: #{tpu_custom_call.1} parent=11 // pred_fallthru
          _
        // Predicated region
        $region37: #{tpu_custom_call.1} parent=11 // pred_check
          %p395 = pneg %p201
        $region38: #{tpu_custom_call.1} parent=11 // pred_check_branch
          %397 = sbr.rel (%p395) target = $region40
        $region39: #{tpu_custom_call.1} parent=11 // pred_region
          %s399 = ssub.s32 2048, 2048
          %400 = vsyncadd [#allocation9], %s399
          %s401 = sshll.u32 [#allocation10], 4
          %s402 = int_to_ptr.vmem [resolvable:$true] %s401
          %407 = dma.hbm_to_vmem [thread:$0]  %s7, 2048, %s402, [#allocation9], 128, 128, 8
        $region40: #{tpu_custom_call.1} parent=11 // pred_fallthru
          _
        // Predicated region
        $region41: #{tpu_custom_call.1} parent=11 // pred_check
          %p408 = pneg %p222
        $region42: #{tpu_custom_call.1} parent=11 // pred_check_branch
          %410 = sbr.rel (%p408) target = $region44
        $region43: #{tpu_custom_call.1} parent=11 // pred_region
          _
        $region44: #{tpu_custom_call.1} parent=11 // pred_fallthru
          _
        // Predicated region
        $region45: #{tpu_custom_call.1} parent=11 // pred_check
          %p411 = pneg %p243
        $region46: #{tpu_custom_call.1} parent=11 // pred_check_branch
          %413 = sbr.rel (%p411) target = $region48
        $region47: #{tpu_custom_call.1} parent=11 // pred_region
          %s415 = ssub.s32 4096, 4096
          %416 = vsyncadd [#allocation12], %s415
          %s417 = sshll.u32 [#allocation11], 4
          %s418 = int_to_ptr.vmem [resolvable:$true] %s417
          %423 = dma.hbm_to_vmem [thread:$0]  %s9, 4096, %s418, [#allocation12], 256, 256, 16
        $region48: #{tpu_custom_call.1} parent=11 // pred_fallthru
          _
        // Predicated region
        $region49: #{tpu_custom_call.1} parent=11 // pred_check
          %p424 = pneg %p264
        $region50: #{tpu_custom_call.1} parent=11 // pred_check_branch
          %426 = sbr.rel (%p424) target = $region52
        $region51: #{tpu_custom_call.1} parent=11 // pred_region
          _
        $region52: #{tpu_custom_call.1} parent=11 // pred_fallthru
          _
        // Predicated region
        $region53: #{tpu_custom_call.1} parent=11 // pred_check
          %p427 = pneg %p285
        $region54: #{tpu_custom_call.1} parent=11 // pred_check_branch
          %429 = sbr.rel (%p427) target = $region56
        $region55: #{tpu_custom_call.1} parent=11 // pred_region
          %s431 = ssub.s32 4096, 4096
          %432 = vsyncadd [#allocation12], %s431
          %s433 = sshll.u32 [#allocation13], 4
          %s434 = int_to_ptr.vmem [resolvable:$true] %s433
          %439 = dma.hbm_to_vmem [thread:$0]  %s11, 4096, %s434, [#allocation12], 128, 128, 8
        $region56: #{tpu_custom_call.1} parent=11 // pred_fallthru
          _
        // Predicated region
        $region57: #{tpu_custom_call.1} parent=11 // pred_check
          %p440 = pneg %p306
        $region58: #{tpu_custom_call.1} parent=11 // pred_check_branch
          %442 = sbr.rel (%p440) target = $region60
        $region59: #{tpu_custom_call.1} parent=11 // pred_region
          _
        $region60: #{tpu_custom_call.1} parent=11 // pred_fallthru
          _
      $region12: #{tpu_custom_call.1} parent=5 // pred_fallthru
        _
      %p443 = scmp.lt.s32.totalorder %s28, 2
      // Predicated region
      $region61: #{tpu_custom_call.1} parent=5 // pred_check
        %p444 = pneg %p443
      $region62: #{tpu_custom_call.1} parent=5 // pred_check_branch
        %446 = sbr.rel (%p444) target = $region64
      $region63: #{tpu_custom_call.1} parent=5 // pred_region
        // Predicated region
        $region65: #{tpu_custom_call.1} parent=63 // pred_check
          %p447 = pneg %p48
        $region66: #{tpu_custom_call.1} parent=63 // pred_check_branch
          %449 = sbr.rel (%p447) target = $region68
        $region67: #{tpu_custom_call.1} parent=63 // pred_region
          %s450 = sand.u32 %s38, 1
          %s451 = scalar_lea.sflag [#allocation3], %s450
          %s452 = sand.u32 %s38, 1
          %s453 = smul.addr %s452, 128
          %s454 = scalar_lea.vmem [#allocation2], %s453
          %s455 = smul.u32 16, %s28
          %s457 = ssub.s32 2048, 2048
          %458 = vsyncadd %s451, %s457
          %s459 = smul.addr %s455, 128
          %s460 = scalar_lea.hbm %s0, %s459
          %s461 = sshll.u32 %s454, 4
          %s462 = int_to_ptr.vmem [resolvable:$true] %s461
          %467 = dma.hbm_to_vmem [thread:$0]  %s460, 2048, %s462, %s451, 128, 128, 8
        $region68: #{tpu_custom_call.1} parent=63 // pred_fallthru
          _
      $region64: #{tpu_custom_call.1} parent=5 // pred_fallthru
        _
      %p468 = scmp.le.s32.totalorder 1, %s28
      %p469 = scmp.lt.s32.totalorder %s28, 3
      %p470 = pnand %p468, %p469
      %p471 = pneg %p470
      // Predicated region
      $region69: #{tpu_custom_call.1} parent=5 // pred_check
        _
      $region70: #{tpu_custom_call.1} parent=5 // pred_check_branch
        %473 = sbr.rel (%p470) target = $region72
      $region71: #{tpu_custom_call.1} parent=5 // pred_region
        %s474 = ssub.s32 %s28, 1
        %s475 = sand.u32 %s41, 1
        %s476 = scalar_lea.sflag [#allocation3], %s475
        %s477 = sand.u32 %s41, 1
        %s478 = smul.addr %s477, 128
        %s479 = scalar_lea.vmem [#allocation2], %s478
        // Predicated region
        $region73: #{tpu_custom_call.1} parent=71 // pred_check
          %p480 = pneg %p54
        $region74: #{tpu_custom_call.1} parent=71 // pred_check_branch
          %482 = sbr.rel (%p480) target = $region76
        $region75: #{tpu_custom_call.1} parent=71 // pred_region
          %483 = dma.done %s476, 2048
        $region76: #{tpu_custom_call.1} parent=71 // pred_fallthru
          _
        // Predicated region
        $region77: #{tpu_custom_call.1} parent=71 // pred_check
          %p484 = pneg %p75
        $region78: #{tpu_custom_call.1} parent=71 // pred_check_branch
          %486 = sbr.rel (%p484) target = $region80
        $region79: #{tpu_custom_call.1} parent=71 // pred_region
          %487 = dma.done [#allocation6], 2048
        $region80: #{tpu_custom_call.1} parent=71 // pred_fallthru
          _
        // Predicated region
        $region81: #{tpu_custom_call.1} parent=71 // pred_check
          %p488 = pneg %p117
        $region82: #{tpu_custom_call.1} parent=71 // pred_check_branch
          %490 = sbr.rel (%p488) target = $region84
        $region83: #{tpu_custom_call.1} parent=71 // pred_region
          %491 = dma.done [#allocation6], 2048
        $region84: #{tpu_custom_call.1} parent=71 // pred_fallthru
          _
        // Predicated region
        $region85: #{tpu_custom_call.1} parent=71 // pred_check
          %p492 = pneg %p159
        $region86: #{tpu_custom_call.1} parent=71 // pred_check_branch
          %494 = sbr.rel (%p492) target = $region88
        $region87: #{tpu_custom_call.1} parent=71 // pred_region
          %495 = dma.done [#allocation9], 2048
        $region88: #{tpu_custom_call.1} parent=71 // pred_fallthru
          _
        // Predicated region
        $region89: #{tpu_custom_call.1} parent=71 // pred_check
          %p496 = pneg %p201
        $region90: #{tpu_custom_call.1} parent=71 // pred_check_branch
          %498 = sbr.rel (%p496) target = $region92
        $region91: #{tpu_custom_call.1} parent=71 // pred_region
          %499 = dma.done [#allocation9], 2048
        $region92: #{tpu_custom_call.1} parent=71 // pred_fallthru
          _
        // Predicated region
        $region93: #{tpu_custom_call.1} parent=71 // pred_check
          %p500 = pneg %p243
        $region94: #{tpu_custom_call.1} parent=71 // pred_check_branch
          %502 = sbr.rel (%p500) target = $region96
        $region95: #{tpu_custom_call.1} parent=71 // pred_region
          %503 = dma.done [#allocation12], 4096
        $region96: #{tpu_custom_call.1} parent=71 // pred_fallthru
          _
        // Predicated region
        $region97: #{tpu_custom_call.1} parent=71 // pred_check
          %p504 = pneg %p285
        $region98: #{tpu_custom_call.1} parent=71 // pred_check_branch
          %506 = sbr.rel (%p504) target = $region100
        $region99: #{tpu_custom_call.1} parent=71 // pred_region
          %507 = dma.done [#allocation12], 4096
        $region100: #{tpu_custom_call.1} parent=71 // pred_fallthru
          _
        %s508 = sand.u32 %s41, 1
        %s509 = scalar_lea.sflag [#allocation3], %s508
        %s510 = sand.u32 %s41, 1
        %s511 = smul.addr %s510, 128
        %s512 = scalar_lea.vmem [#allocation2], %s511
        %p513 = pneg %p54
        %p514 = pneg %p51
        %p515 = pneg %p75
        %p516 = pneg %p72
        %p517 = pneg %p96
        %p518 = pneg %p93
        %p519 = pneg %p117
        %p520 = pneg %p114
        %p521 = pneg %p138
        %p522 = pneg %p135
        %p523 = pneg %p159
        %p524 = pneg %p156
        %p525 = pneg %p180
        %p526 = pneg %p177
        %p527 = pneg %p201
        %p528 = pneg %p198
        %p529 = pneg %p222
        %p530 = pneg %p219
        %p531 = pneg %p243
        %p532 = pneg %p240
        %p533 = pneg %p264
        %p534 = pneg %p261
        %p535 = pneg %p285
        %p536 = pneg %p282
        %p537 = pneg %p306
        %p538 = pneg %p303
        %p539 = pneg %p332
        %p540 = pneg %p329
        %s541 = sand.u32 %s319, 1
        %s542 = scalar_lea.sflag [#allocation4], %s541
        %s543 = sand.u32 %s319, 1
        %s544 = smul.addr %s543, 128
        %s545 = scalar_lea.vmem [#allocation14], %s544
        %s546 = smul.u32 16, %s33
        %s547 = smul.u32 16, %s33
        %v548 = vld [vmem:[%s479] sm:$0xff]
        %v549 = vld [vmem:[%s479 + $0x8] sm:$0xff]
        %v550 = vld [vmem:[%s479 + $0x10] sm:$0xff]
        %v551 = vld [vmem:[%s479 + $0x18] sm:$0xff]
        %v552 = vld [vmem:[%s479 + $0x20] sm:$0xff]
        %v553 = vld [vmem:[%s479 + $0x28] sm:$0xff]
        %v554 = vld [vmem:[%s479 + $0x30] sm:$0xff]
        %v555 = vld [vmem:[%s479 + $0x38] sm:$0xff]
        %v556 = vld [vmem:[%s479 + $0x40] sm:$0xff]
        %v557 = vld [vmem:[%s479 + $0x48] sm:$0xff]
        %v558 = vld [vmem:[%s479 + $0x50] sm:$0xff]
        %v559 = vld [vmem:[%s479 + $0x58] sm:$0xff]
        %v560 = vld [vmem:[%s479 + $0x60] sm:$0xff]
        %v561 = vld [vmem:[%s479 + $0x68] sm:$0xff]
        %v562 = vld [vmem:[%s479 + $0x70] sm:$0xff]
        %v563 = vld [vmem:[%s479 + $0x78] sm:$0xff]
        %v564 = vld [vmem:[#allocation5] sm:$0xff]
        %v565 = vld [vmem:[#allocation5 + $0x8] sm:$0xff]
        %v566 = vld [vmem:[#allocation5 + $0x10] sm:$0xff]
        %v567 = vld [vmem:[#allocation5 + $0x18] sm:$0xff]
        %v568 = vld [vmem:[#allocation5 + $0x20] sm:$0xff]
        %v569 = vld [vmem:[#allocation5 + $0x28] sm:$0xff]
        %v570 = vld [vmem:[#allocation5 + $0x30] sm:$0xff]
        %v571 = vld [vmem:[#allocation5 + $0x38] sm:$0xff]
        %v572 = vld [vmem:[#allocation5 + $0x40] sm:$0xff]
        %v573 = vld [vmem:[#allocation5 + $0x48] sm:$0xff]
        %v574 = vld [vmem:[#allocation5 + $0x50] sm:$0xff]
        %v575 = vld [vmem:[#allocation5 + $0x58] sm:$0xff]
        %v576 = vld [vmem:[#allocation5 + $0x60] sm:$0xff]
        %v577 = vld [vmem:[#allocation5 + $0x68] sm:$0xff]
        %v578 = vld [vmem:[#allocation5 + $0x70] sm:$0xff]
        %v579 = vld [vmem:[#allocation5 + $0x78] sm:$0xff]
        %v580 = vld [vmem:[%s2] sm:$0x1]
        %v582 = vlaneseq
        %v583 = vshrl.u32 %v582, 7
        %v584 = vsub.s32 0, %v583
        %v585 = vrot.slane %v580, %v584
        %587 = vmatprep.subr.mxu0 0.0
        %588 = vmatpush1.msra.mxu0 %v579
        %589 = vmatprep.subr.mxu0 0.0
        %590 = vmatpush1.msra.mxu0 %v578
        %591 = vmatprep.subr.mxu0 0.0
        %592 = vmatpush1.msra.mxu0 %v577
        %593 = vmatprep.subr.mxu0 0.0
        %594 = vmatpush1.msra.mxu0 %v576
        %595 = vmatprep.subr.mxu0 0.0
        %596 = vmatpush1.msra.mxu0 %v575
        %597 = vmatprep.subr.mxu0 0.0
        %598 = vmatpush1.msra.mxu0 %v574
        %599 = vmatprep.subr.mxu0 0.0
        %600 = vmatpush1.msra.mxu0 %v573
        %601 = vmatprep.subr.mxu0 0.0
        %602 = vmatpush1.msra.mxu0 %v572
        %603 = vmatprep.subr.mxu0 0.0
        %604 = vmatpush1.msra.mxu0 %v571
        %605 = vmatprep.subr.mxu0 0.0
        %606 = vmatpush1.msra.mxu0 %v570
        %607 = vmatprep.subr.mxu0 0.0
        %608 = vmatpush1.msra.mxu0 %v569
        %609 = vmatprep.subr.mxu0 0.0
        %610 = vmatpush1.msra.mxu0 %v568
        %611 = vmatprep.subr.mxu0 0.0
        %612 = vmatpush1.msra.mxu0 %v567
        %613 = vmatprep.subr.mxu0 0.0
        %614 = vmatpush1.msra.mxu0 %v566
        %615 = vmatprep.subr.mxu0 0.0
        %616 = vmatpush1.msra.mxu0 %v565
        %617 = vmatprep.subr.mxu0 0.0
        %618 = vmatpush1.msra.mxu0 %v564
        %619 = vmatprep.subr.mxu0 0.0
        %620 = vmatpush2.msra.mxu0 0.0
        %621 = vmatprep.subr.mxu0 0.0
        %622 = vmatpush2.msra.mxu0 0.0
        %623 = vmatprep.subr.mxu0 0.0
        %624 = vmatpush2.msra.mxu0 0.0
        %625 = vmatprep.subr.mxu0 0.0
        %626 = vmatpush2.msra.mxu0 0.0
        %627 = vmatprep.subr.mxu0 0.0
        %628 = vmatpush2.msra.mxu0 0.0
        %629 = vmatprep.subr.mxu0 0.0
        %630 = vmatpush2.msra.mxu0 0.0
        %631 = vmatprep.subr.mxu0 0.0
        %632 = vmatpush2.msra.mxu0 0.0
        %633 = vmatprep.subr.mxu0 0.0
        %634 = vmatpush2.msra.mxu0 0.0
        %635 = vmatprep.subr.mxu0 0.0
        %636 = vmatpush2.msra.mxu0 0.0
        %637 = vmatprep.subr.mxu0 0.0
        %638 = vmatpush2.msra.mxu0 0.0
        %639 = vmatprep.subr.mxu0 0.0
        %640 = vmatpush2.msra.mxu0 0.0
        %641 = vmatprep.subr.mxu0 0.0
        %642 = vmatpush2.msra.mxu0 0.0
        %643 = vmatprep.subr.mxu0 0.0
        %644 = vmatpush2.msra.mxu0 0.0
        %645 = vmatprep.subr.mxu0 0.0
        %646 = vmatpush2.msra.mxu0 0.0
        %647 = vmatprep.subr.mxu0 0.0
        %648 = vmatpush2.msra.mxu0 0.0
        %649 = vmatprep.subr.mxu0 0.0
        %650 = vmatpush2.msra.mxu0 0.0
        %651 = vmatprep.mubr.f32.mxu0 0.0
        %652 = vmatmul.mubr.f32.gmra.mxu0 %v548
        %v653 = vpop.f32.mrf.mxu0
        %v654 = vadd.f32 %v585, %v653
        %v655 = vpop.f32.mrf.mxu0
        %656 = vmatprep.mubr.f32.mxu0 0.0
        %657 = vmatmul.mubr.f32.gmra.mxu0 %v549
        %v658 = vpop.f32.mrf.mxu0
        %v659 = vadd.f32 %v585, %v658
        %v660 = vpop.f32.mrf.mxu0
        %661 = vmatprep.mubr.f32.mxu0 0.0
        %662 = vmatmul.mubr.f32.gmra.mxu0 %v550
        %v663 = vpop.f32.mrf.mxu0
        %v664 = vadd.f32 %v585, %v663
        %v665 = vpop.f32.mrf.mxu0
        %666 = vmatprep.mubr.f32.mxu0 0.0
        %667 = vmatmul.mubr.f32.gmra.mxu0 %v551
        %v668 = vpop.f32.mrf.mxu0
        %v669 = vadd.f32 %v585, %v668
        %v670 = vpop.f32.mrf.mxu0
        %671 = vmatprep.mubr.f32.mxu0 0.0
        %672 = vmatmul.mubr.f32.gmra.mxu0 %v552
        %v673 = vpop.f32.mrf.mxu0
        %v674 = vadd.f32 %v585, %v673
        %v675 = vpop.f32.mrf.mxu0
        %676 = vmatprep.mubr.f32.mxu0 0.0
        %677 = vmatmul.mubr.f32.gmra.mxu0 %v553
        %v678 = vpop.f32.mrf.mxu0
        %v679 = vadd.f32 %v585, %v678
        %v680 = vpop.f32.mrf.mxu0
        %681 = vmatprep.mubr.f32.mxu0 0.0
        %682 = vmatmul.mubr.f32.gmra.mxu0 %v554
        %v683 = vpop.f32.mrf.mxu0
        %v684 = vadd.f32 %v585, %v683
        %v685 = vpop.f32.mrf.mxu0
        %686 = vmatprep.mubr.f32.mxu0 0.0
        %687 = vmatmul.mubr.f32.gmra.mxu0 %v555
        %v688 = vpop.f32.mrf.mxu0
        %v689 = vadd.f32 %v585, %v688
        %v690 = vpop.f32.mrf.mxu0
        %691 = vmatprep.mubr.f32.mxu0 0.0
        %692 = vmatmul.mubr.f32.gmra.mxu0 %v556
        %v693 = vpop.f32.mrf.mxu0
        %v694 = vadd.f32 %v585, %v693
        %v695 = vpop.f32.mrf.mxu0
        %696 = vmatprep.mubr.f32.mxu0 0.0
        %697 = vmatmul.mubr.f32.gmra.mxu0 %v557
        %v698 = vpop.f32.mrf.mxu0
        %v699 = vadd.f32 %v585, %v698
        %v700 = vpop.f32.mrf.mxu0
        %701 = vmatprep.mubr.f32.mxu0 0.0
        %702 = vmatmul.mubr.f32.gmra.mxu0 %v558
        %v703 = vpop.f32.mrf.mxu0
        %v704 = vadd.f32 %v585, %v703
        %v705 = vpop.f32.mrf.mxu0
        %706 = vmatprep.mubr.f32.mxu0 0.0
        %707 = vmatmul.mubr.f32.gmra.mxu0 %v559
        %v708 = vpop.f32.mrf.mxu0
        %v709 = vadd.f32 %v585, %v708
        %v710 = vpop.f32.mrf.mxu0
        %711 = vmatprep.mubr.f32.mxu0 0.0
        %712 = vmatmul.mubr.f32.gmra.mxu0 %v560
        %v713 = vpop.f32.mrf.mxu0
        %v714 = vadd.f32 %v585, %v713
        %v715 = vpop.f32.mrf.mxu0
        %716 = vmatprep.mubr.f32.mxu0 0.0
        %717 = vmatmul.mubr.f32.gmra.mxu0 %v561
        %v718 = vpop.f32.mrf.mxu0
        %v719 = vadd.f32 %v585, %v718
        %v720 = vpop.f32.mrf.mxu0
        %721 = vmatprep.mubr.f32.mxu0 0.0
        %722 = vmatmul.mubr.f32.gmra.mxu0 %v562
        %v723 = vpop.f32.mrf.mxu0
        %v724 = vadd.f32 %v585, %v723
        %v725 = vpop.f32.mrf.mxu0
        %726 = vmatprep.mubr.f32.mxu0 0.0
        %727 = vmatmul.mubr.f32.gmra.mxu0 %v563
        %v728 = vpop.f32.mrf.mxu0
        %v729 = vadd.f32 %v585, %v728
        %v730 = vpop.f32.mrf.mxu0
        %731 = vdwg.mxu0
        %v732 = vmax.f32 %v654, 0.0
        %v733 = vmax.f32 %v659, 0.0
        %v734 = vmax.f32 %v664, 0.0
        %v735 = vmax.f32 %v669, 0.0
        %v736 = vmax.f32 %v674, 0.0
        %v737 = vmax.f32 %v679, 0.0
        %v738 = vmax.f32 %v684, 0.0
        %v739 = vmax.f32 %v689, 0.0
        %v740 = vmax.f32 %v694, 0.0
        %v741 = vmax.f32 %v699, 0.0
        %v742 = vmax.f32 %v704, 0.0
        %v743 = vmax.f32 %v709, 0.0
        %v744 = vmax.f32 %v714, 0.0
        %v745 = vmax.f32 %v719, 0.0
        %v746 = vmax.f32 %v724, 0.0
        %v747 = vmax.f32 %v729, 0.0
        %v748 = vld [vmem:[#allocation7] sm:$0xff]
        %v749 = vld [vmem:[#allocation7 + $0x8] sm:$0xff]
        %v750 = vld [vmem:[#allocation7 + $0x10] sm:$0xff]
        %v751 = vld [vmem:[#allocation7 + $0x18] sm:$0xff]
        %v752 = vld [vmem:[#allocation7 + $0x20] sm:$0xff]
        %v753 = vld [vmem:[#allocation7 + $0x28] sm:$0xff]
        %v754 = vld [vmem:[#allocation7 + $0x30] sm:$0xff]
        %v755 = vld [vmem:[#allocation7 + $0x38] sm:$0xff]
        %v756 = vld [vmem:[#allocation7 + $0x40] sm:$0xff]
        %v757 = vld [vmem:[#allocation7 + $0x48] sm:$0xff]
        %v758 = vld [vmem:[#allocation7 + $0x50] sm:$0xff]
        %v759 = vld [vmem:[#allocation7 + $0x58] sm:$0xff]
        %v760 = vld [vmem:[#allocation7 + $0x60] sm:$0xff]
        %v761 = vld [vmem:[#allocation7 + $0x68] sm:$0xff]
        %v762 = vld [vmem:[#allocation7 + $0x70] sm:$0xff]
        %v763 = vld [vmem:[#allocation7 + $0x78] sm:$0xff]
        %v764 = vld [vmem:[%s4] sm:$0x1]
        %v766 = vlaneseq
        %v767 = vshrl.u32 %v766, 7
        %v768 = vsub.s32 0, %v767
        %v769 = vrot.slane %v764, %v768
        %771 = vmatprep.subr.mxu0 0.0
        %772 = vmatpush1.msra.mxu0 %v763
        %773 = vmatprep.subr.mxu0 0.0
        %774 = vmatpush1.msra.mxu0 %v762
        %775 = vmatprep.subr.mxu0 0.0
        %776 = vmatpush1.msra.mxu0 %v761
        %777 = vmatprep.subr.mxu0 0.0
        %778 = vmatpush1.msra.mxu0 %v760
        %779 = vmatprep.subr.mxu0 0.0
        %780 = vmatpush1.msra.mxu0 %v759
        %781 = vmatprep.subr.mxu0 0.0
        %782 = vmatpush1.msra.mxu0 %v758
        %783 = vmatprep.subr.mxu0 0.0
        %784 = vmatpush1.msra.mxu0 %v757
        %785 = vmatprep.subr.mxu0 0.0
        %786 = vmatpush1.msra.mxu0 %v756
        %787 = vmatprep.subr.mxu0 0.0
        %788 = vmatpush1.msra.mxu0 %v755
        %789 = vmatprep.subr.mxu0 0.0
        %790 = vmatpush1.msra.mxu0 %v754
        %791 = vmatprep.subr.mxu0 0.0
        %792 = vmatpush1.msra.mxu0 %v753
        %793 = vmatprep.subr.mxu0 0.0
        %794 = vmatpush1.msra.mxu0 %v752
        %795 = vmatprep.subr.mxu0 0.0
        %796 = vmatpush1.msra.mxu0 %v751
        %797 = vmatprep.subr.mxu0 0.0
        %798 = vmatpush1.msra.mxu0 %v750
        %799 = vmatprep.subr.mxu0 0.0
        %800 = vmatpush1.msra.mxu0 %v749
        %801 = vmatprep.subr.mxu0 0.0
        %802 = vmatpush1.msra.mxu0 %v748
        %803 = vmatprep.subr.mxu0 0.0
        %804 = vmatpush2.msra.mxu0 0.0
        %805 = vmatprep.subr.mxu0 0.0
        %806 = vmatpush2.msra.mxu0 0.0
        %807 = vmatprep.subr.mxu0 0.0
        %808 = vmatpush2.msra.mxu0 0.0
        %809 = vmatprep.subr.mxu0 0.0
        %810 = vmatpush2.msra.mxu0 0.0
        %811 = vmatprep.subr.mxu0 0.0
        %812 = vmatpush2.msra.mxu0 0.0
        %813 = vmatprep.subr.mxu0 0.0
        %814 = vmatpush2.msra.mxu0 0.0
        %815 = vmatprep.subr.mxu0 0.0
        %816 = vmatpush2.msra.mxu0 0.0
        %817 = vmatprep.subr.mxu0 0.0
        %818 = vmatpush2.msra.mxu0 0.0
        %819 = vmatprep.subr.mxu0 0.0
        %820 = vmatpush2.msra.mxu0 0.0
        %821 = vmatprep.subr.mxu0 0.0
        %822 = vmatpush2.msra.mxu0 0.0
        %823 = vmatprep.subr.mxu0 0.0
        %824 = vmatpush2.msra.mxu0 0.0
        %825 = vmatprep.subr.mxu0 0.0
        %826 = vmatpush2.msra.mxu0 0.0
        %827 = vmatprep.subr.mxu0 0.0
        %828 = vmatpush2.msra.mxu0 0.0
        %829 = vmatprep.subr.mxu0 0.0
        %830 = vmatpush2.msra.mxu0 0.0
        %831 = vmatprep.subr.mxu0 0.0
        %832 = vmatpush2.msra.mxu0 0.0
        %833 = vmatprep.subr.mxu0 0.0
        %834 = vmatpush2.msra.mxu0 0.0
        %835 = vmatprep.mubr.f32.mxu0 0.0
        %836 = vmatmul.mubr.f32.gmra.mxu0 %v732
        %v837 = vpop.f32.mrf.mxu0
        %v838 = vadd.f32 %v769, %v837
        %v839 = vpop.f32.mrf.mxu0
        %840 = vmatprep.mubr.f32.mxu0 0.0
        %841 = vmatmul.mubr.f32.gmra.mxu0 %v733
        %v842 = vpop.f32.mrf.mxu0
        %v843 = vadd.f32 %v769, %v842
        %v844 = vpop.f32.mrf.mxu0
        %845 = vmatprep.mubr.f32.mxu0 0.0
        %846 = vmatmul.mubr.f32.gmra.mxu0 %v734
        %v847 = vpop.f32.mrf.mxu0
        %v848 = vadd.f32 %v769, %v847
        %v849 = vpop.f32.mrf.mxu0
        %850 = vmatprep.mubr.f32.mxu0 0.0
        %851 = vmatmul.mubr.f32.gmra.mxu0 %v735
        %v852 = vpop.f32.mrf.mxu0
        %v853 = vadd.f32 %v769, %v852
        %v854 = vpop.f32.mrf.mxu0
        %855 = vmatprep.mubr.f32.mxu0 0.0
        %856 = vmatmul.mubr.f32.gmra.mxu0 %v736
        %v857 = vpop.f32.mrf.mxu0
        %v858 = vadd.f32 %v769, %v857
        %v859 = vpop.f32.mrf.mxu0
        %860 = vmatprep.mubr.f32.mxu0 0.0
        %861 = vmatmul.mubr.f32.gmra.mxu0 %v737
        %v862 = vpop.f32.mrf.mxu0
        %v863 = vadd.f32 %v769, %v862
        %v864 = vpop.f32.mrf.mxu0
        %865 = vmatprep.mubr.f32.mxu0 0.0
        %866 = vmatmul.mubr.f32.gmra.mxu0 %v738
        %v867 = vpop.f32.mrf.mxu0
        %v868 = vadd.f32 %v769, %v867
        %v869 = vpop.f32.mrf.mxu0
        %870 = vmatprep.mubr.f32.mxu0 0.0
        %871 = vmatmul.mubr.f32.gmra.mxu0 %v739
        %v872 = vpop.f32.mrf.mxu0
        %v873 = vadd.f32 %v769, %v872
        %v874 = vpop.f32.mrf.mxu0
        %875 = vmatprep.mubr.f32.mxu0 0.0
        %876 = vmatmul.mubr.f32.gmra.mxu0 %v740
        %v877 = vpop.f32.mrf.mxu0
        %v878 = vadd.f32 %v769, %v877
        %v879 = vpop.f32.mrf.mxu0
        %880 = vmatprep.mubr.f32.mxu0 0.0
        %881 = vmatmul.mubr.f32.gmra.mxu0 %v741
        %v882 = vpop.f32.mrf.mxu0
        %v883 = vadd.f32 %v769, %v882
        %v884 = vpop.f32.mrf.mxu0
        %885 = vmatprep.mubr.f32.mxu0 0.0
        %886 = vmatmul.mubr.f32.gmra.mxu0 %v742
        %v887 = vpop.f32.mrf.mxu0
        %v888 = vadd.f32 %v769, %v887
        %v889 = vpop.f32.mrf.mxu0
        %890 = vmatprep.mubr.f32.mxu0 0.0
        %891 = vmatmul.mubr.f32.gmra.mxu0 %v743
        %v892 = vpop.f32.mrf.mxu0
        %v893 = vadd.f32 %v769, %v892
        %v894 = vpop.f32.mrf.mxu0
        %895 = vmatprep.mubr.f32.mxu0 0.0
        %896 = vmatmul.mubr.f32.gmra.mxu0 %v744
        %v897 = vpop.f32.mrf.mxu0
        %v898 = vadd.f32 %v769, %v897
        %v899 = vpop.f32.mrf.mxu0
        %900 = vmatprep.mubr.f32.mxu0 0.0
        %901 = vmatmul.mubr.f32.gmra.mxu0 %v745
        %v902 = vpop.f32.mrf.mxu0
        %v903 = vadd.f32 %v769, %v902
        %v904 = vpop.f32.mrf.mxu0
        %905 = vmatprep.mubr.f32.mxu0 0.0
        %906 = vmatmul.mubr.f32.gmra.mxu0 %v746
        %v907 = vpop.f32.mrf.mxu0
        %v908 = vadd.f32 %v769, %v907
        %v909 = vpop.f32.mrf.mxu0
        %910 = vmatprep.mubr.f32.mxu0 0.0
        %911 = vmatmul.mubr.f32.gmra.mxu0 %v747
        %v912 = vpop.f32.mrf.mxu0
        %v913 = vadd.f32 %v769, %v912
        %v914 = vpop.f32.mrf.mxu0
        %915 = vdwg.mxu0
        %v916 = vmax.f32 %v838, 0.0
        %v917 = vmax.f32 %v843, 0.0
        %v918 = vmax.f32 %v848, 0.0
        %v919 = vmax.f32 %v853, 0.0
        %v920 = vmax.f32 %v858, 0.0
        %v921 = vmax.f32 %v863, 0.0
        %v922 = vmax.f32 %v868, 0.0
        %v923 = vmax.f32 %v873, 0.0
        %v924 = vmax.f32 %v878, 0.0
        %v925 = vmax.f32 %v883, 0.0
        %v926 = vmax.f32 %v888, 0.0
        %v927 = vmax.f32 %v893, 0.0
        %v928 = vmax.f32 %v898, 0.0
        %v929 = vmax.f32 %v903, 0.0
        %v930 = vmax.f32 %v908, 0.0
        %v931 = vmax.f32 %v913, 0.0
        %v932 = vld [vmem:[#allocation8] sm:$0xff]
        %v933 = vld [vmem:[#allocation8 + $0x8] sm:$0xff]
        %v934 = vld [vmem:[#allocation8 + $0x10] sm:$0xff]
        %v935 = vld [vmem:[#allocation8 + $0x18] sm:$0xff]
        %v936 = vld [vmem:[#allocation8 + $0x20] sm:$0xff]
        %v937 = vld [vmem:[#allocation8 + $0x28] sm:$0xff]
        %v938 = vld [vmem:[#allocation8 + $0x30] sm:$0xff]
        %v939 = vld [vmem:[#allocation8 + $0x38] sm:$0xff]
        %v940 = vld [vmem:[#allocation8 + $0x40] sm:$0xff]
        %v941 = vld [vmem:[#allocation8 + $0x48] sm:$0xff]
        %v942 = vld [vmem:[#allocation8 + $0x50] sm:$0xff]
        %v943 = vld [vmem:[#allocation8 + $0x58] sm:$0xff]
        %v944 = vld [vmem:[#allocation8 + $0x60] sm:$0xff]
        %v945 = vld [vmem:[#allocation8 + $0x68] sm:$0xff]
        %v946 = vld [vmem:[#allocation8 + $0x70] sm:$0xff]
        %v947 = vld [vmem:[#allocation8 + $0x78] sm:$0xff]
        %v948 = vld [vmem:[%s6] sm:$0x1]
        %v950 = vlaneseq
        %v951 = vshrl.u32 %v950, 7
        %v952 = vsub.s32 0, %v951
        %v953 = vrot.slane %v948, %v952
        %955 = vmatprep.subr.mxu0 0.0
        %956 = vmatpush1.msra.mxu0 %v947
        %957 = vmatprep.subr.mxu0 0.0
        %958 = vmatpush1.msra.mxu0 %v946
        %959 = vmatprep.subr.mxu0 0.0
        %960 = vmatpush1.msra.mxu0 %v945
        %961 = vmatprep.subr.mxu0 0.0
        %962 = vmatpush1.msra.mxu0 %v944
        %963 = vmatprep.subr.mxu0 0.0
        %964 = vmatpush1.msra.mxu0 %v943
        %965 = vmatprep.subr.mxu0 0.0
        %966 = vmatpush1.msra.mxu0 %v942
        %967 = vmatprep.subr.mxu0 0.0
        %968 = vmatpush1.msra.mxu0 %v941
        %969 = vmatprep.subr.mxu0 0.0
        %970 = vmatpush1.msra.mxu0 %v940
        %971 = vmatprep.subr.mxu0 0.0
        %972 = vmatpush1.msra.mxu0 %v939
        %973 = vmatprep.subr.mxu0 0.0
        %974 = vmatpush1.msra.mxu0 %v938
        %975 = vmatprep.subr.mxu0 0.0
        %976 = vmatpush1.msra.mxu0 %v937
        %977 = vmatprep.subr.mxu0 0.0
        %978 = vmatpush1.msra.mxu0 %v936
        %979 = vmatprep.subr.mxu0 0.0
        %980 = vmatpush1.msra.mxu0 %v935
        %981 = vmatprep.subr.mxu0 0.0
        %982 = vmatpush1.msra.mxu0 %v934
        %983 = vmatprep.subr.mxu0 0.0
        %984 = vmatpush1.msra.mxu0 %v933
        %985 = vmatprep.subr.mxu0 0.0
        %986 = vmatpush1.msra.mxu0 %v932
        %987 = vmatprep.subr.mxu0 0.0
        %988 = vmatpush2.msra.mxu0 0.0
        %989 = vmatprep.subr.mxu0 0.0
        %990 = vmatpush2.msra.mxu0 0.0
        %991 = vmatprep.subr.mxu0 0.0
        %992 = vmatpush2.msra.mxu0 0.0
        %993 = vmatprep.subr.mxu0 0.0
        %994 = vmatpush2.msra.mxu0 0.0
        %995 = vmatprep.subr.mxu0 0.0
        %996 = vmatpush2.msra.mxu0 0.0
        %997 = vmatprep.subr.mxu0 0.0
        %998 = vmatpush2.msra.mxu0 0.0
        %999 = vmatprep.subr.mxu0 0.0
        %1000 = vmatpush2.msra.mxu0 0.0
        %1001 = vmatprep.subr.mxu0 0.0
        %1002 = vmatpush2.msra.mxu0 0.0
        %1003 = vmatprep.subr.mxu0 0.0
        %1004 = vmatpush2.msra.mxu0 0.0
        %1005 = vmatprep.subr.mxu0 0.0
        %1006 = vmatpush2.msra.mxu0 0.0
        %1007 = vmatprep.subr.mxu0 0.0
        %1008 = vmatpush2.msra.mxu0 0.0
        %1009 = vmatprep.subr.mxu0 0.0
        %1010 = vmatpush2.msra.mxu0 0.0
        %1011 = vmatprep.subr.mxu0 0.0
        %1012 = vmatpush2.msra.mxu0 0.0
        %1013 = vmatprep.subr.mxu0 0.0
        %1014 = vmatpush2.msra.mxu0 0.0
        %1015 = vmatprep.subr.mxu0 0.0
        %1016 = vmatpush2.msra.mxu0 0.0
        %1017 = vmatprep.subr.mxu0 0.0
        %1018 = vmatpush2.msra.mxu0 0.0
        %1019 = vmatprep.mubr.f32.mxu0 0.0
        %1020 = vmatmul.mubr.f32.gmra.mxu0 %v916
        %v1021 = vpop.f32.mrf.mxu0
        %v1022 = vadd.f32 %v953, %v1021
        %v1023 = vpop.f32.mrf.mxu0
        %1024 = vmatprep.mubr.f32.mxu0 0.0
        %1025 = vmatmul.mubr.f32.gmra.mxu0 %v917
        %v1026 = vpop.f32.mrf.mxu0
        %v1027 = vadd.f32 %v953, %v1026
        %v1028 = vpop.f32.mrf.mxu0
        %1029 = vmatprep.mubr.f32.mxu0 0.0
        %1030 = vmatmul.mubr.f32.gmra.mxu0 %v918
        %v1031 = vpop.f32.mrf.mxu0
        %v1032 = vadd.f32 %v953, %v1031
        %v1033 = vpop.f32.mrf.mxu0
        %1034 = vmatprep.mubr.f32.mxu0 0.0
        %1035 = vmatmul.mubr.f32.gmra.mxu0 %v919
        %v1036 = vpop.f32.mrf.mxu0
        %v1037 = vadd.f32 %v953, %v1036
        %v1038 = vpop.f32.mrf.mxu0
        %1039 = vmatprep.mubr.f32.mxu0 0.0
        %1040 = vmatmul.mubr.f32.gmra.mxu0 %v920
        %v1041 = vpop.f32.mrf.mxu0
        %v1042 = vadd.f32 %v953, %v1041
        %v1043 = vpop.f32.mrf.mxu0
        %1044 = vmatprep.mubr.f32.mxu0 0.0
        %1045 = vmatmul.mubr.f32.gmra.mxu0 %v921
        %v1046 = vpop.f32.mrf.mxu0
        %v1047 = vadd.f32 %v953, %v1046
        %v1048 = vpop.f32.mrf.mxu0
        %1049 = vmatprep.mubr.f32.mxu0 0.0
        %1050 = vmatmul.mubr.f32.gmra.mxu0 %v922
        %v1051 = vpop.f32.mrf.mxu0
        %v1052 = vadd.f32 %v953, %v1051
        %v1053 = vpop.f32.mrf.mxu0
        %1054 = vmatprep.mubr.f32.mxu0 0.0
        %1055 = vmatmul.mubr.f32.gmra.mxu0 %v923
        %v1056 = vpop.f32.mrf.mxu0
        %v1057 = vadd.f32 %v953, %v1056
        %v1058 = vpop.f32.mrf.mxu0
        %1059 = vmatprep.mubr.f32.mxu0 0.0
        %1060 = vmatmul.mubr.f32.gmra.mxu0 %v924
        %v1061 = vpop.f32.mrf.mxu0
        %v1062 = vadd.f32 %v953, %v1061
        %v1063 = vpop.f32.mrf.mxu0
        %1064 = vmatprep.mubr.f32.mxu0 0.0
        %1065 = vmatmul.mubr.f32.gmra.mxu0 %v925
        %v1066 = vpop.f32.mrf.mxu0
        %v1067 = vadd.f32 %v953, %v1066
        %v1068 = vpop.f32.mrf.mxu0
        %1069 = vmatprep.mubr.f32.mxu0 0.0
        %1070 = vmatmul.mubr.f32.gmra.mxu0 %v926
        %v1071 = vpop.f32.mrf.mxu0
        %v1072 = vadd.f32 %v953, %v1071
        %v1073 = vpop.f32.mrf.mxu0
        %1074 = vmatprep.mubr.f32.mxu0 0.0
        %1075 = vmatmul.mubr.f32.gmra.mxu0 %v927
        %v1076 = vpop.f32.mrf.mxu0
        %v1077 = vadd.f32 %v953, %v1076
        %v1078 = vpop.f32.mrf.mxu0
        %1079 = vmatprep.mubr.f32.mxu0 0.0
        %1080 = vmatmul.mubr.f32.gmra.mxu0 %v928
        %v1081 = vpop.f32.mrf.mxu0
        %v1082 = vadd.f32 %v953, %v1081
        %v1083 = vpop.f32.mrf.mxu0
        %1084 = vmatprep.mubr.f32.mxu0 0.0
        %1085 = vmatmul.mubr.f32.gmra.mxu0 %v929
        %v1086 = vpop.f32.mrf.mxu0
        %v1087 = vadd.f32 %v953, %v1086
        %v1088 = vpop.f32.mrf.mxu0
        %1089 = vmatprep.mubr.f32.mxu0 0.0
        %1090 = vmatmul.mubr.f32.gmra.mxu0 %v930
        %v1091 = vpop.f32.mrf.mxu0
        %v1092 = vadd.f32 %v953, %v1091
        %v1093 = vpop.f32.mrf.mxu0
        %1094 = vmatprep.mubr.f32.mxu0 0.0
        %1095 = vmatmul.mubr.f32.gmra.mxu0 %v931
        %v1096 = vpop.f32.mrf.mxu0
        %v1097 = vadd.f32 %v953, %v1096
        %v1098 = vpop.f32.mrf.mxu0
        %1099 = vdwg.mxu0
        %v1100 = vmax.f32 %v1022, 0.0
        %v1101 = vmax.f32 %v1027, 0.0
        %v1102 = vmax.f32 %v1032, 0.0
        %v1103 = vmax.f32 %v1037, 0.0
        %v1104 = vmax.f32 %v1042, 0.0
        %v1105 = vmax.f32 %v1047, 0.0
        %v1106 = vmax.f32 %v1052, 0.0
        %v1107 = vmax.f32 %v1057, 0.0
        %v1108 = vmax.f32 %v1062, 0.0
        %v1109 = vmax.f32 %v1067, 0.0
        %v1110 = vmax.f32 %v1072, 0.0
        %v1111 = vmax.f32 %v1077, 0.0
        %v1112 = vmax.f32 %v1082, 0.0
        %v1113 = vmax.f32 %v1087, 0.0
        %v1114 = vmax.f32 %v1092, 0.0
        %v1115 = vmax.f32 %v1097, 0.0
        %v1116 = vld [vmem:[#allocation10] sm:$0xff]
        %v1117 = vld [vmem:[#allocation10 + $0x8] sm:$0xff]
        %v1118 = vld [vmem:[#allocation10 + $0x10] sm:$0xff]
        %v1119 = vld [vmem:[#allocation10 + $0x18] sm:$0xff]
        %v1120 = vld [vmem:[#allocation10 + $0x20] sm:$0xff]
        %v1121 = vld [vmem:[#allocation10 + $0x28] sm:$0xff]
        %v1122 = vld [vmem:[#allocation10 + $0x30] sm:$0xff]
        %v1123 = vld [vmem:[#allocation10 + $0x38] sm:$0xff]
        %v1124 = vld [vmem:[#allocation10 + $0x40] sm:$0xff]
        %v1125 = vld [vmem:[#allocation10 + $0x48] sm:$0xff]
        %v1126 = vld [vmem:[#allocation10 + $0x50] sm:$0xff]
        %v1127 = vld [vmem:[#allocation10 + $0x58] sm:$0xff]
        %v1128 = vld [vmem:[#allocation10 + $0x60] sm:$0xff]
        %v1129 = vld [vmem:[#allocation10 + $0x68] sm:$0xff]
        %v1130 = vld [vmem:[#allocation10 + $0x70] sm:$0xff]
        %v1131 = vld [vmem:[#allocation10 + $0x78] sm:$0xff]
        %v1132 = vld [vmem:[%s8] sm:$0x1]
        %v1134 = vlaneseq
        %v1135 = vshrl.u32 %v1134, 7
        %v1136 = vsub.s32 0, %v1135
        %v1137 = vrot.slane %v1132, %v1136
        %1139 = vmatprep.subr.mxu0 0.0
        %1140 = vmatpush1.msra.mxu0 %v1131
        %1141 = vmatprep.subr.mxu0 0.0
        %1142 = vmatpush1.msra.mxu0 %v1130
        %1143 = vmatprep.subr.mxu0 0.0
        %1144 = vmatpush1.msra.mxu0 %v1129
        %1145 = vmatprep.subr.mxu0 0.0
        %1146 = vmatpush1.msra.mxu0 %v1128
        %1147 = vmatprep.subr.mxu0 0.0
        %1148 = vmatpush1.msra.mxu0 %v1127
        %1149 = vmatprep.subr.mxu0 0.0
        %1150 = vmatpush1.msra.mxu0 %v1126
        %1151 = vmatprep.subr.mxu0 0.0
        %1152 = vmatpush1.msra.mxu0 %v1125
        %1153 = vmatprep.subr.mxu0 0.0
        %1154 = vmatpush1.msra.mxu0 %v1124
        %1155 = vmatprep.subr.mxu0 0.0
        %1156 = vmatpush1.msra.mxu0 %v1123
        %1157 = vmatprep.subr.mxu0 0.0
        %1158 = vmatpush1.msra.mxu0 %v1122
        %1159 = vmatprep.subr.mxu0 0.0
        %1160 = vmatpush1.msra.mxu0 %v1121
        %1161 = vmatprep.subr.mxu0 0.0
        %1162 = vmatpush1.msra.mxu0 %v1120
        %1163 = vmatprep.subr.mxu0 0.0
        %1164 = vmatpush1.msra.mxu0 %v1119
        %1165 = vmatprep.subr.mxu0 0.0
        %1166 = vmatpush1.msra.mxu0 %v1118
        %1167 = vmatprep.subr.mxu0 0.0
        %1168 = vmatpush1.msra.mxu0 %v1117
        %1169 = vmatprep.subr.mxu0 0.0
        %1170 = vmatpush1.msra.mxu0 %v1116
        %1171 = vmatprep.subr.mxu0 0.0
        %1172 = vmatpush2.msra.mxu0 0.0
        %1173 = vmatprep.subr.mxu0 0.0
        %1174 = vmatpush2.msra.mxu0 0.0
        %1175 = vmatprep.subr.mxu0 0.0
        %1176 = vmatpush2.msra.mxu0 0.0
        %1177 = vmatprep.subr.mxu0 0.0
        %1178 = vmatpush2.msra.mxu0 0.0
        %1179 = vmatprep.subr.mxu0 0.0
        %1180 = vmatpush2.msra.mxu0 0.0
        %1181 = vmatprep.subr.mxu0 0.0
        %1182 = vmatpush2.msra.mxu0 0.0
        %1183 = vmatprep.subr.mxu0 0.0
        %1184 = vmatpush2.msra.mxu0 0.0
        %1185 = vmatprep.subr.mxu0 0.0
        %1186 = vmatpush2.msra.mxu0 0.0
        %1187 = vmatprep.subr.mxu0 0.0
        %1188 = vmatpush2.msra.mxu0 0.0
        %1189 = vmatprep.subr.mxu0 0.0
        %1190 = vmatpush2.msra.mxu0 0.0
        %1191 = vmatprep.subr.mxu0 0.0
        %1192 = vmatpush2.msra.mxu0 0.0
        %1193 = vmatprep.subr.mxu0 0.0
        %1194 = vmatpush2.msra.mxu0 0.0
        %1195 = vmatprep.subr.mxu0 0.0
        %1196 = vmatpush2.msra.mxu0 0.0
        %1197 = vmatprep.subr.mxu0 0.0
        %1198 = vmatpush2.msra.mxu0 0.0
        %1199 = vmatprep.subr.mxu0 0.0
        %1200 = vmatpush2.msra.mxu0 0.0
        %1201 = vmatprep.subr.mxu0 0.0
        %1202 = vmatpush2.msra.mxu0 0.0
        %1203 = vmatprep.mubr.f32.mxu0 0.0
        %1204 = vmatmul.mubr.f32.gmra.mxu0 %v1100
        %v1205 = vpop.f32.mrf.mxu0
        %v1206 = vadd.f32 %v1137, %v1205
        %v1207 = vpop.f32.mrf.mxu0
        %1208 = vmatprep.mubr.f32.mxu0 0.0
        %1209 = vmatmul.mubr.f32.gmra.mxu0 %v1101
        %v1210 = vpop.f32.mrf.mxu0
        %v1211 = vadd.f32 %v1137, %v1210
        %v1212 = vpop.f32.mrf.mxu0
        %1213 = vmatprep.mubr.f32.mxu0 0.0
        %1214 = vmatmul.mubr.f32.gmra.mxu0 %v1102
        %v1215 = vpop.f32.mrf.mxu0
        %v1216 = vadd.f32 %v1137, %v1215
        %v1217 = vpop.f32.mrf.mxu0
        %1218 = vmatprep.mubr.f32.mxu0 0.0
        %1219 = vmatmul.mubr.f32.gmra.mxu0 %v1103
        %v1220 = vpop.f32.mrf.mxu0
        %v1221 = vadd.f32 %v1137, %v1220
        %v1222 = vpop.f32.mrf.mxu0
        %1223 = vmatprep.mubr.f32.mxu0 0.0
        %1224 = vmatmul.mubr.f32.gmra.mxu0 %v1104
        %v1225 = vpop.f32.mrf.mxu0
        %v1226 = vadd.f32 %v1137, %v1225
        %v1227 = vpop.f32.mrf.mxu0
        %1228 = vmatprep.mubr.f32.mxu0 0.0
        %1229 = vmatmul.mubr.f32.gmra.mxu0 %v1105
        %v1230 = vpop.f32.mrf.mxu0
        %v1231 = vadd.f32 %v1137, %v1230
        %v1232 = vpop.f32.mrf.mxu0
        %1233 = vmatprep.mubr.f32.mxu0 0.0
        %1234 = vmatmul.mubr.f32.gmra.mxu0 %v1106
        %v1235 = vpop.f32.mrf.mxu0
        %v1236 = vadd.f32 %v1137, %v1235
        %v1237 = vpop.f32.mrf.mxu0
        %1238 = vmatprep.mubr.f32.mxu0 0.0
        %1239 = vmatmul.mubr.f32.gmra.mxu0 %v1107
        %v1240 = vpop.f32.mrf.mxu0
        %v1241 = vadd.f32 %v1137, %v1240
        %v1242 = vpop.f32.mrf.mxu0
        %1243 = vmatprep.mubr.f32.mxu0 0.0
        %1244 = vmatmul.mubr.f32.gmra.mxu0 %v1108
        %v1245 = vpop.f32.mrf.mxu0
        %v1246 = vadd.f32 %v1137, %v1245
        %v1247 = vpop.f32.mrf.mxu0
        %1248 = vmatprep.mubr.f32.mxu0 0.0
        %1249 = vmatmul.mubr.f32.gmra.mxu0 %v1109
        %v1250 = vpop.f32.mrf.mxu0
        %v1251 = vadd.f32 %v1137, %v1250
        %v1252 = vpop.f32.mrf.mxu0
        %1253 = vmatprep.mubr.f32.mxu0 0.0
        %1254 = vmatmul.mubr.f32.gmra.mxu0 %v1110
        %v1255 = vpop.f32.mrf.mxu0
        %v1256 = vadd.f32 %v1137, %v1255
        %v1257 = vpop.f32.mrf.mxu0
        %1258 = vmatprep.mubr.f32.mxu0 0.0
        %1259 = vmatmul.mubr.f32.gmra.mxu0 %v1111
        %v1260 = vpop.f32.mrf.mxu0
        %v1261 = vadd.f32 %v1137, %v1260
        %v1262 = vpop.f32.mrf.mxu0
        %1263 = vmatprep.mubr.f32.mxu0 0.0
        %1264 = vmatmul.mubr.f32.gmra.mxu0 %v1112
        %v1265 = vpop.f32.mrf.mxu0
        %v1266 = vadd.f32 %v1137, %v1265
        %v1267 = vpop.f32.mrf.mxu0
        %1268 = vmatprep.mubr.f32.mxu0 0.0
        %1269 = vmatmul.mubr.f32.gmra.mxu0 %v1113
        %v1270 = vpop.f32.mrf.mxu0
        %v1271 = vadd.f32 %v1137, %v1270
        %v1272 = vpop.f32.mrf.mxu0
        %1273 = vmatprep.mubr.f32.mxu0 0.0
        %1274 = vmatmul.mubr.f32.gmra.mxu0 %v1114
        %v1275 = vpop.f32.mrf.mxu0
        %v1276 = vadd.f32 %v1137, %v1275
        %v1277 = vpop.f32.mrf.mxu0
        %1278 = vmatprep.mubr.f32.mxu0 0.0
        %1279 = vmatmul.mubr.f32.gmra.mxu0 %v1115
        %v1280 = vpop.f32.mrf.mxu0
        %v1281 = vadd.f32 %v1137, %v1280
        %v1282 = vpop.f32.mrf.mxu0
        %1283 = vdwg.mxu0
        %v1284 = vmax.f32 %v1206, 0.0
        %v1285 = vmax.f32 %v1211, 0.0
        %v1286 = vmax.f32 %v1216, 0.0
        %v1287 = vmax.f32 %v1221, 0.0
        %v1288 = vmax.f32 %v1226, 0.0
        %v1289 = vmax.f32 %v1231, 0.0
        %v1290 = vmax.f32 %v1236, 0.0
        %v1291 = vmax.f32 %v1241, 0.0
        %v1292 = vmax.f32 %v1246, 0.0
        %v1293 = vmax.f32 %v1251, 0.0
        %v1294 = vmax.f32 %v1256, 0.0
        %v1295 = vmax.f32 %v1261, 0.0
        %v1296 = vmax.f32 %v1266, 0.0
        %v1297 = vmax.f32 %v1271, 0.0
        %v1298 = vmax.f32 %v1276, 0.0
        %v1299 = vmax.f32 %v1281, 0.0
        %v1300 = vld [vmem:[#allocation11] sm:$0xff]
        %v1301 = vld [vmem:[#allocation11 + $0x8] sm:$0xff]
        %v1302 = vld [vmem:[#allocation11 + $0x10] sm:$0xff]
        %v1303 = vld [vmem:[#allocation11 + $0x18] sm:$0xff]
        %v1304 = vld [vmem:[#allocation11 + $0x20] sm:$0xff]
        %v1305 = vld [vmem:[#allocation11 + $0x28] sm:$0xff]
        %v1306 = vld [vmem:[#allocation11 + $0x30] sm:$0xff]
        %v1307 = vld [vmem:[#allocation11 + $0x38] sm:$0xff]
        %v1308 = vld [vmem:[#allocation11 + $0x40] sm:$0xff]
        %v1309 = vld [vmem:[#allocation11 + $0x48] sm:$0xff]
        %v1310 = vld [vmem:[#allocation11 + $0x50] sm:$0xff]
        %v1311 = vld [vmem:[#allocation11 + $0x58] sm:$0xff]
        %v1312 = vld [vmem:[#allocation11 + $0x60] sm:$0xff]
        %v1313 = vld [vmem:[#allocation11 + $0x68] sm:$0xff]
        %v1314 = vld [vmem:[#allocation11 + $0x70] sm:$0xff]
        %v1315 = vld [vmem:[#allocation11 + $0x78] sm:$0xff]
        %v1316 = vld [vmem:[#allocation11 + $0x80] sm:$0xff]
        %v1317 = vld [vmem:[#allocation11 + $0x88] sm:$0xff]
        %v1318 = vld [vmem:[#allocation11 + $0x90] sm:$0xff]
        %v1319 = vld [vmem:[#allocation11 + $0x98] sm:$0xff]
        %v1320 = vld [vmem:[#allocation11 + $0xa0] sm:$0xff]
        %v1321 = vld [vmem:[#allocation11 + $0xa8] sm:$0xff]
        %v1322 = vld [vmem:[#allocation11 + $0xb0] sm:$0xff]
        %v1323 = vld [vmem:[#allocation11 + $0xb8] sm:$0xff]
        %v1324 = vld [vmem:[#allocation11 + $0xc0] sm:$0xff]
        %v1325 = vld [vmem:[#allocation11 + $0xc8] sm:$0xff]
        %v1326 = vld [vmem:[#allocation11 + $0xd0] sm:$0xff]
        %v1327 = vld [vmem:[#allocation11 + $0xd8] sm:$0xff]
        %v1328 = vld [vmem:[#allocation11 + $0xe0] sm:$0xff]
        %v1329 = vld [vmem:[#allocation11 + $0xe8] sm:$0xff]
        %v1330 = vld [vmem:[#allocation11 + $0xf0] sm:$0xff]
        %v1331 = vld [vmem:[#allocation11 + $0xf8] sm:$0xff]
        %v1332 = vld [vmem:[%s10] sm:$0x3]
        %v1334 = vlaneseq
        %v1335 = vshrl.u32 %v1334, 7
        %v1336 = vsub.s32 0, %v1335
        %v1337 = vrot.slane %v1332, %v1336
        %v1338 = vlaneseq
        %v1339 = vshrl.u32 %v1338, 7
        %v1340 = vsub.s32 1, %v1339
        %v1341 = vrot.slane %v1332, %v1340
        %1344 = vmatprep.subr.mxu0 %v1331
        %1345 = vmatpush1.msra.mxu0 %v1330
        %1346 = vmatprep.subr.mxu0 %v1329
        %1347 = vmatpush1.msra.mxu0 %v1328
        %1348 = vmatprep.subr.mxu0 %v1327
        %1349 = vmatpush1.msra.mxu0 %v1326
        %1350 = vmatprep.subr.mxu0 %v1325
        %1351 = vmatpush1.msra.mxu0 %v1324
        %1352 = vmatprep.subr.mxu0 %v1323
        %1353 = vmatpush1.msra.mxu0 %v1322
        %1354 = vmatprep.subr.mxu0 %v1321
        %1355 = vmatpush1.msra.mxu0 %v1320
        %1356 = vmatprep.subr.mxu0 %v1319
        %1357 = vmatpush1.msra.mxu0 %v1318
        %1358 = vmatprep.subr.mxu0 %v1317
        %1359 = vmatpush1.msra.mxu0 %v1316
        %1360 = vmatprep.subr.mxu0 %v1315
        %1361 = vmatpush1.msra.mxu0 %v1314
        %1362 = vmatprep.subr.mxu0 %v1313
        %1363 = vmatpush1.msra.mxu0 %v1312
        %1364 = vmatprep.subr.mxu0 %v1311
        %1365 = vmatpush1.msra.mxu0 %v1310
        %1366 = vmatprep.subr.mxu0 %v1309
        %1367 = vmatpush1.msra.mxu0 %v1308
        %1368 = vmatprep.subr.mxu0 %v1307
        %1369 = vmatpush1.msra.mxu0 %v1306
        %1370 = vmatprep.subr.mxu0 %v1305
        %1371 = vmatpush1.msra.mxu0 %v1304
        %1372 = vmatprep.subr.mxu0 %v1303
        %1373 = vmatpush1.msra.mxu0 %v1302
        %1374 = vmatprep.subr.mxu0 %v1301
        %1375 = vmatpush1.msra.mxu0 %v1300
        %1376 = vmatprep.subr.mxu0 0.0
        %1377 = vmatpush2.msra.mxu0 0.0
        %1378 = vmatprep.subr.mxu0 0.0
        %1379 = vmatpush2.msra.mxu0 0.0
        %1380 = vmatprep.subr.mxu0 0.0
        %1381 = vmatpush2.msra.mxu0 0.0
        %1382 = vmatprep.subr.mxu0 0.0
        %1383 = vmatpush2.msra.mxu0 0.0
        %1384 = vmatprep.subr.mxu0 0.0
        %1385 = vmatpush2.msra.mxu0 0.0
        %1386 = vmatprep.subr.mxu0 0.0
        %1387 = vmatpush2.msra.mxu0 0.0
        %1388 = vmatprep.subr.mxu0 0.0
        %1389 = vmatpush2.msra.mxu0 0.0
        %1390 = vmatprep.subr.mxu0 0.0
        %1391 = vmatpush2.msra.mxu0 0.0
        %1392 = vmatprep.subr.mxu0 0.0
        %1393 = vmatpush2.msra.mxu0 0.0
        %1394 = vmatprep.subr.mxu0 0.0
        %1395 = vmatpush2.msra.mxu0 0.0
        %1396 = vmatprep.subr.mxu0 0.0
        %1397 = vmatpush2.msra.mxu0 0.0
        %1398 = vmatprep.subr.mxu0 0.0
        %1399 = vmatpush2.msra.mxu0 0.0
        %1400 = vmatprep.subr.mxu0 0.0
        %1401 = vmatpush2.msra.mxu0 0.0
        %1402 = vmatprep.subr.mxu0 0.0
        %1403 = vmatpush2.msra.mxu0 0.0
        %1404 = vmatprep.subr.mxu0 0.0
        %1405 = vmatpush2.msra.mxu0 0.0
        %1406 = vmatprep.subr.mxu0 0.0
        %1407 = vmatpush2.msra.mxu0 0.0
        %1408 = vmatprep.mubr.f32.mxu0 0.0
        %1409 = vmatmul.mubr.f32.gmra.mxu0 %v1284
        %v1410 = vpop.f32.mrf.mxu0
        %v1411 = vadd.f32 %v1337, %v1410
        %v1412 = vpop.f32.mrf.mxu0
        %v1413 = vadd.f32 %v1341, %v1412
        %1414 = vmatprep.mubr.f32.mxu0 0.0
        %1415 = vmatmul.mubr.f32.gmra.mxu0 %v1285
        %v1416 = vpop.f32.mrf.mxu0
        %v1417 = vadd.f32 %v1337, %v1416
        %v1418 = vpop.f32.mrf.mxu0
        %v1419 = vadd.f32 %v1341, %v1418
        %1420 = vmatprep.mubr.f32.mxu0 0.0
        %1421 = vmatmul.mubr.f32.gmra.mxu0 %v1286
        %v1422 = vpop.f32.mrf.mxu0
        %v1423 = vadd.f32 %v1337, %v1422
        %v1424 = vpop.f32.mrf.mxu0
        %v1425 = vadd.f32 %v1341, %v1424
        %1426 = vmatprep.mubr.f32.mxu0 0.0
        %1427 = vmatmul.mubr.f32.gmra.mxu0 %v1287
        %v1428 = vpop.f32.mrf.mxu0
        %v1429 = vadd.f32 %v1337, %v1428
        %v1430 = vpop.f32.mrf.mxu0
        %v1431 = vadd.f32 %v1341, %v1430
        %1432 = vmatprep.mubr.f32.mxu0 0.0
        %1433 = vmatmul.mubr.f32.gmra.mxu0 %v1288
        %v1434 = vpop.f32.mrf.mxu0
        %v1435 = vadd.f32 %v1337, %v1434
        %v1436 = vpop.f32.mrf.mxu0
        %v1437 = vadd.f32 %v1341, %v1436
        %1438 = vmatprep.mubr.f32.mxu0 0.0
        %1439 = vmatmul.mubr.f32.gmra.mxu0 %v1289
        %v1440 = vpop.f32.mrf.mxu0
        %v1441 = vadd.f32 %v1337, %v1440
        %v1442 = vpop.f32.mrf.mxu0
        %v1443 = vadd.f32 %v1341, %v1442
        %1444 = vmatprep.mubr.f32.mxu0 0.0
        %1445 = vmatmul.mubr.f32.gmra.mxu0 %v1290
        %v1446 = vpop.f32.mrf.mxu0
        %v1447 = vadd.f32 %v1337, %v1446
        %v1448 = vpop.f32.mrf.mxu0
        %v1449 = vadd.f32 %v1341, %v1448
        %1450 = vmatprep.mubr.f32.mxu0 0.0
        %1451 = vmatmul.mubr.f32.gmra.mxu0 %v1291
        %v1452 = vpop.f32.mrf.mxu0
        %v1453 = vadd.f32 %v1337, %v1452
        %v1454 = vpop.f32.mrf.mxu0
        %v1455 = vadd.f32 %v1341, %v1454
        %1456 = vmatprep.mubr.f32.mxu0 0.0
        %1457 = vmatmul.mubr.f32.gmra.mxu0 %v1292
        %v1458 = vpop.f32.mrf.mxu0
        %v1459 = vadd.f32 %v1337, %v1458
        %v1460 = vpop.f32.mrf.mxu0
        %v1461 = vadd.f32 %v1341, %v1460
        %1462 = vmatprep.mubr.f32.mxu0 0.0
        %1463 = vmatmul.mubr.f32.gmra.mxu0 %v1293
        %v1464 = vpop.f32.mrf.mxu0
        %v1465 = vadd.f32 %v1337, %v1464
        %v1466 = vpop.f32.mrf.mxu0
        %v1467 = vadd.f32 %v1341, %v1466
        %1468 = vmatprep.mubr.f32.mxu0 0.0
        %1469 = vmatmul.mubr.f32.gmra.mxu0 %v1294
        %v1470 = vpop.f32.mrf.mxu0
        %v1471 = vadd.f32 %v1337, %v1470
        %v1472 = vpop.f32.mrf.mxu0
        %v1473 = vadd.f32 %v1341, %v1472
        %1474 = vmatprep.mubr.f32.mxu0 0.0
        %1475 = vmatmul.mubr.f32.gmra.mxu0 %v1295
        %v1476 = vpop.f32.mrf.mxu0
        %v1477 = vadd.f32 %v1337, %v1476
        %v1478 = vpop.f32.mrf.mxu0
        %v1479 = vadd.f32 %v1341, %v1478
        %1480 = vmatprep.mubr.f32.mxu0 0.0
        %1481 = vmatmul.mubr.f32.gmra.mxu0 %v1296
        %v1482 = vpop.f32.mrf.mxu0
        %v1483 = vadd.f32 %v1337, %v1482
        %v1484 = vpop.f32.mrf.mxu0
        %v1485 = vadd.f32 %v1341, %v1484
        %1486 = vmatprep.mubr.f32.mxu0 0.0
        %1487 = vmatmul.mubr.f32.gmra.mxu0 %v1297
        %v1488 = vpop.f32.mrf.mxu0
        %v1489 = vadd.f32 %v1337, %v1488
        %v1490 = vpop.f32.mrf.mxu0
        %v1491 = vadd.f32 %v1341, %v1490
        %1492 = vmatprep.mubr.f32.mxu0 0.0
        %1493 = vmatmul.mubr.f32.gmra.mxu0 %v1298
        %v1494 = vpop.f32.mrf.mxu0
        %v1495 = vadd.f32 %v1337, %v1494
        %v1496 = vpop.f32.mrf.mxu0
        %v1497 = vadd.f32 %v1341, %v1496
        %1498 = vmatprep.mubr.f32.mxu0 0.0
        %1499 = vmatmul.mubr.f32.gmra.mxu0 %v1299
        %v1500 = vpop.f32.mrf.mxu0
        %v1501 = vadd.f32 %v1337, %v1500
        %v1502 = vpop.f32.mrf.mxu0
        %v1503 = vadd.f32 %v1341, %v1502
        %1504 = vdwg.mxu0
        %v1505 = vmax.f32 %v1411, 0.0
        %v1506 = vmax.f32 %v1413, 0.0
        %v1507 = vmax.f32 %v1417, 0.0
        %v1508 = vmax.f32 %v1419, 0.0
        %v1509 = vmax.f32 %v1423, 0.0
        %v1510 = vmax.f32 %v1425, 0.0
        %v1511 = vmax.f32 %v1429, 0.0
        %v1512 = vmax.f32 %v1431, 0.0
        %v1513 = vmax.f32 %v1435, 0.0
        %v1514 = vmax.f32 %v1437, 0.0
        %v1515 = vmax.f32 %v1441, 0.0
        %v1516 = vmax.f32 %v1443, 0.0
        %v1517 = vmax.f32 %v1447, 0.0
        %v1518 = vmax.f32 %v1449, 0.0
        %v1519 = vmax.f32 %v1453, 0.0
        %v1520 = vmax.f32 %v1455, 0.0
        %v1521 = vmax.f32 %v1459, 0.0
        %v1522 = vmax.f32 %v1461, 0.0
        %v1523 = vmax.f32 %v1465, 0.0
        %v1524 = vmax.f32 %v1467, 0.0
        %v1525 = vmax.f32 %v1471, 0.0
        %v1526 = vmax.f32 %v1473, 0.0
        %v1527 = vmax.f32 %v1477, 0.0
        %v1528 = vmax.f32 %v1479, 0.0
        %v1529 = vmax.f32 %v1483, 0.0
        %v1530 = vmax.f32 %v1485, 0.0
        %v1531 = vmax.f32 %v1489, 0.0
        %v1532 = vmax.f32 %v1491, 0.0
        %v1533 = vmax.f32 %v1495, 0.0
        %v1534 = vmax.f32 %v1497, 0.0
        %v1535 = vmax.f32 %v1501, 0.0
        %v1536 = vmax.f32 %v1503, 0.0
        %v1537 = vld [vmem:[#allocation13] sm:$0xff]
        %v1538 = vld [vmem:[#allocation13 + $0x8] sm:$0xff]
        %v1539 = vld [vmem:[#allocation13 + $0x10] sm:$0xff]
        %v1540 = vld [vmem:[#allocation13 + $0x18] sm:$0xff]
        %v1541 = vld [vmem:[#allocation13 + $0x20] sm:$0xff]
        %v1542 = vld [vmem:[#allocation13 + $0x28] sm:$0xff]
        %v1543 = vld [vmem:[#allocation13 + $0x30] sm:$0xff]
        %v1544 = vld [vmem:[#allocation13 + $0x38] sm:$0xff]
        %v1545 = vld [vmem:[#allocation13 + $0x40] sm:$0xff]
        %v1546 = vld [vmem:[#allocation13 + $0x48] sm:$0xff]
        %v1547 = vld [vmem:[#allocation13 + $0x50] sm:$0xff]
        %v1548 = vld [vmem:[#allocation13 + $0x58] sm:$0xff]
        %v1549 = vld [vmem:[#allocation13 + $0x60] sm:$0xff]
        %v1550 = vld [vmem:[#allocation13 + $0x68] sm:$0xff]
        %v1551 = vld [vmem:[#allocation13 + $0x70] sm:$0xff]
        %v1552 = vld [vmem:[#allocation13 + $0x78] sm:$0xff]
        %v1553 = vld [vmem:[#allocation13 + $0x80] sm:$0xff]
        %v1554 = vld [vmem:[#allocation13 + $0x88] sm:$0xff]
        %v1555 = vld [vmem:[#allocation13 + $0x90] sm:$0xff]
        %v1556 = vld [vmem:[#allocation13 + $0x98] sm:$0xff]
        %v1557 = vld [vmem:[#allocation13 + $0xa0] sm:$0xff]
        %v1558 = vld [vmem:[#allocation13 + $0xa8] sm:$0xff]
        %v1559 = vld [vmem:[#allocation13 + $0xb0] sm:$0xff]
        %v1560 = vld [vmem:[#allocation13 + $0xb8] sm:$0xff]
        %v1561 = vld [vmem:[#allocation13 + $0xc0] sm:$0xff]
        %v1562 = vld [vmem:[#allocation13 + $0xc8] sm:$0xff]
        %v1563 = vld [vmem:[#allocation13 + $0xd0] sm:$0xff]
        %v1564 = vld [vmem:[#allocation13 + $0xd8] sm:$0xff]
        %v1565 = vld [vmem:[#allocation13 + $0xe0] sm:$0xff]
        %v1566 = vld [vmem:[#allocation13 + $0xe8] sm:$0xff]
        %v1567 = vld [vmem:[#allocation13 + $0xf0] sm:$0xff]
        %v1568 = vld [vmem:[#allocation13 + $0xf8] sm:$0xff]
        %v1569 = vld [vmem:[%s12] sm:$0x1]
        %v1571 = vlaneseq
        %v1572 = vshrl.u32 %v1571, 7
        %v1573 = vsub.s32 0, %v1572
        %v1574 = vrot.slane %v1569, %v1573
        %1576 = vmatprep.subr.mxu0 0.0
        %1577 = vmatpush1.msra.mxu0 %v1552
        %1578 = vmatprep.subr.mxu0 0.0
        %1579 = vmatpush1.msra.mxu0 %v1551
        %1580 = vmatprep.subr.mxu0 0.0
        %1581 = vmatpush1.msra.mxu0 %v1550
        %1582 = vmatprep.subr.mxu0 0.0
        %1583 = vmatpush1.msra.mxu0 %v1549
        %1584 = vmatprep.subr.mxu0 0.0
        %1585 = vmatpush1.msra.mxu0 %v1548
        %1586 = vmatprep.subr.mxu0 0.0
        %1587 = vmatpush1.msra.mxu0 %v1547
        %1588 = vmatprep.subr.mxu0 0.0
        %1589 = vmatpush1.msra.mxu0 %v1546
        %1590 = vmatprep.subr.mxu0 0.0
        %1591 = vmatpush1.msra.mxu0 %v1545
        %1592 = vmatprep.subr.mxu0 0.0
        %1593 = vmatpush1.msra.mxu0 %v1544
        %1594 = vmatprep.subr.mxu0 0.0
        %1595 = vmatpush1.msra.mxu0 %v1543
        %1596 = vmatprep.subr.mxu0 0.0
        %1597 = vmatpush1.msra.mxu0 %v1542
        %1598 = vmatprep.subr.mxu0 0.0
        %1599 = vmatpush1.msra.mxu0 %v1541
        %1600 = vmatprep.subr.mxu0 0.0
        %1601 = vmatpush1.msra.mxu0 %v1540
        %1602 = vmatprep.subr.mxu0 0.0
        %1603 = vmatpush1.msra.mxu0 %v1539
        %1604 = vmatprep.subr.mxu0 0.0
        %1605 = vmatpush1.msra.mxu0 %v1538
        %1606 = vmatprep.subr.mxu0 0.0
        %1607 = vmatpush1.msra.mxu0 %v1537
        %1608 = vmatprep.subr.mxu0 0.0
        %1609 = vmatpush2.msra.mxu0 %v1568
        %1610 = vmatprep.subr.mxu0 0.0
        %1611 = vmatpush2.msra.mxu0 %v1567
        %1612 = vmatprep.subr.mxu0 0.0
        %1613 = vmatpush2.msra.mxu0 %v1566
        %1614 = vmatprep.subr.mxu0 0.0
        %1615 = vmatpush2.msra.mxu0 %v1565
        %1616 = vmatprep.subr.mxu0 0.0
        %1617 = vmatpush2.msra.mxu0 %v1564
        %1618 = vmatprep.subr.mxu0 0.0
        %1619 = vmatpush2.msra.mxu0 %v1563
        %1620 = vmatprep.subr.mxu0 0.0
        %1621 = vmatpush2.msra.mxu0 %v1562
        %1622 = vmatprep.subr.mxu0 0.0
        %1623 = vmatpush2.msra.mxu0 %v1561
        %1624 = vmatprep.subr.mxu0 0.0
        %1625 = vmatpush2.msra.mxu0 %v1560
        %1626 = vmatprep.subr.mxu0 0.0
        %1627 = vmatpush2.msra.mxu0 %v1559
        %1628 = vmatprep.subr.mxu0 0.0
        %1629 = vmatpush2.msra.mxu0 %v1558
        %1630 = vmatprep.subr.mxu0 0.0
        %1631 = vmatpush2.msra.mxu0 %v1557
        %1632 = vmatprep.subr.mxu0 0.0
        %1633 = vmatpush2.msra.mxu0 %v1556
        %1634 = vmatprep.subr.mxu0 0.0
        %1635 = vmatpush2.msra.mxu0 %v1555
        %1636 = vmatprep.subr.mxu0 0.0
        %1637 = vmatpush2.msra.mxu0 %v1554
        %1638 = vmatprep.subr.mxu0 0.0
        %1639 = vmatpush2.msra.mxu0 %v1553
        %1640 = vmatprep.mubr.f32.mxu0 %v1506
        %1641 = vmatmul.mubr.f32.gmra.mxu0 %v1505
        %v1642 = vpop.f32.mrf.mxu0
        %v1643 = vadd.f32 %v1574, %v1642
        %v1644 = vpop.f32.mrf.mxu0
        %1645 = vmatprep.mubr.f32.mxu0 %v1508
        %1646 = vmatmul.mubr.f32.gmra.mxu0 %v1507
        %v1647 = vpop.f32.mrf.mxu0
        %v1648 = vadd.f32 %v1574, %v1647
        %v1649 = vpop.f32.mrf.mxu0
        %1650 = vmatprep.mubr.f32.mxu0 %v1510
        %1651 = vmatmul.mubr.f32.gmra.mxu0 %v1509
        %v1652 = vpop.f32.mrf.mxu0
        %v1653 = vadd.f32 %v1574, %v1652
        %v1654 = vpop.f32.mrf.mxu0
        %1655 = vmatprep.mubr.f32.mxu0 %v1512
        %1656 = vmatmul.mubr.f32.gmra.mxu0 %v1511
        %v1657 = vpop.f32.mrf.mxu0
        %v1658 = vadd.f32 %v1574, %v1657
        %v1659 = vpop.f32.mrf.mxu0
        %1660 = vmatprep.mubr.f32.mxu0 %v1514
        %1661 = vmatmul.mubr.f32.gmra.mxu0 %v1513
        %v1662 = vpop.f32.mrf.mxu0
        %v1663 = vadd.f32 %v1574, %v1662
        %v1664 = vpop.f32.mrf.mxu0
        %1665 = vmatprep.mubr.f32.mxu0 %v1516
        %1666 = vmatmul.mubr.f32.gmra.mxu0 %v1515
        %v1667 = vpop.f32.mrf.mxu0
        %v1668 = vadd.f32 %v1574, %v1667
        %v1669 = vpop.f32.mrf.mxu0
        %1670 = vmatprep.mubr.f32.mxu0 %v1518
        %1671 = vmatmul.mubr.f32.gmra.mxu0 %v1517
        %v1672 = vpop.f32.mrf.mxu0
        %v1673 = vadd.f32 %v1574, %v1672
        %v1674 = vpop.f32.mrf.mxu0
        %1675 = vmatprep.mubr.f32.mxu0 %v1520
        %1676 = vmatmul.mubr.f32.gmra.mxu0 %v1519
        %v1677 = vpop.f32.mrf.mxu0
        %v1678 = vadd.f32 %v1574, %v1677
        %v1679 = vpop.f32.mrf.mxu0
        %1680 = vmatprep.mubr.f32.mxu0 %v1522
        %1681 = vmatmul.mubr.f32.gmra.mxu0 %v1521
        %v1682 = vpop.f32.mrf.mxu0
        %v1683 = vadd.f32 %v1574, %v1682
        %v1684 = vpop.f32.mrf.mxu0
        %1685 = vmatprep.mubr.f32.mxu0 %v1524
        %1686 = vmatmul.mubr.f32.gmra.mxu0 %v1523
        %v1687 = vpop.f32.mrf.mxu0
        %v1688 = vadd.f32 %v1574, %v1687
        %v1689 = vpop.f32.mrf.mxu0
        %1690 = vmatprep.mubr.f32.mxu0 %v1526
        %1691 = vmatmul.mubr.f32.gmra.mxu0 %v1525
        %v1692 = vpop.f32.mrf.mxu0
        %v1693 = vadd.f32 %v1574, %v1692
        %v1694 = vpop.f32.mrf.mxu0
        %1695 = vmatprep.mubr.f32.mxu0 %v1528
        %1696 = vmatmul.mubr.f32.gmra.mxu0 %v1527
        %v1697 = vpop.f32.mrf.mxu0
        %v1698 = vadd.f32 %v1574, %v1697
        %v1699 = vpop.f32.mrf.mxu0
        %1700 = vmatprep.mubr.f32.mxu0 %v1530
        %1701 = vmatmul.mubr.f32.gmra.mxu0 %v1529
        %v1702 = vpop.f32.mrf.mxu0
        %v1703 = vadd.f32 %v1574, %v1702
        %v1704 = vpop.f32.mrf.mxu0
        %1705 = vmatprep.mubr.f32.mxu0 %v1532
        %1706 = vmatmul.mubr.f32.gmra.mxu0 %v1531
        %v1707 = vpop.f32.mrf.mxu0
        %v1708 = vadd.f32 %v1574, %v1707
        %v1709 = vpop.f32.mrf.mxu0
        %1710 = vmatprep.mubr.f32.mxu0 %v1534
        %1711 = vmatmul.mubr.f32.gmra.mxu0 %v1533
        %v1712 = vpop.f32.mrf.mxu0
        %v1713 = vadd.f32 %v1574, %v1712
        %v1714 = vpop.f32.mrf.mxu0
        %1715 = vmatprep.mubr.f32.mxu0 %v1536
        %1716 = vmatmul.mubr.f32.gmra.mxu0 %v1535
        %v1717 = vpop.f32.mrf.mxu0
        %v1718 = vadd.f32 %v1574, %v1717
        %v1719 = vpop.f32.mrf.mxu0
        %1720 = vdwg.mxu0
        %v1721 = vxor.u32 %v1643, 2147483648
        %v1722 = vxor.u32 %v1648, 2147483648
        %v1723 = vxor.u32 %v1653, 2147483648
        %v1724 = vxor.u32 %v1658, 2147483648
        %v1725 = vxor.u32 %v1663, 2147483648
        %v1726 = vxor.u32 %v1668, 2147483648
        %v1727 = vxor.u32 %v1673, 2147483648
        %v1728 = vxor.u32 %v1678, 2147483648
        %v1729 = vxor.u32 %v1683, 2147483648
        %v1730 = vxor.u32 %v1688, 2147483648
        %v1731 = vxor.u32 %v1693, 2147483648
        %v1732 = vxor.u32 %v1698, 2147483648
        %v1733 = vxor.u32 %v1703, 2147483648
        %v1734 = vxor.u32 %v1708, 2147483648
        %v1735 = vxor.u32 %v1713, 2147483648
        %v1736 = vxor.u32 %v1718, 2147483648
        %v1737 = vmul.f32 %v1721, 1.442695
        %v1738 = vpow.pop %v1737
        %v1739 = vmul.f32 %v1722, 1.442695
        %v1740 = vpow.pop %v1739
        %v1741 = vmul.f32 %v1723, 1.442695
        %v1742 = vpow.pop %v1741
        %v1743 = vmul.f32 %v1724, 1.442695
        %v1744 = vpow.pop %v1743
        %v1745 = vmul.f32 %v1725, 1.442695
        %v1746 = vpow.pop %v1745
        %v1747 = vmul.f32 %v1726, 1.442695
        %v1748 = vpow.pop %v1747
        %v1749 = vmul.f32 %v1727, 1.442695
        %v1750 = vpow.pop %v1749
        %v1751 = vmul.f32 %v1728, 1.442695
        %v1752 = vpow.pop %v1751
        %v1753 = vmul.f32 %v1729, 1.442695
        %v1754 = vpow.pop %v1753
        %v1755 = vmul.f32 %v1730, 1.442695
        %v1756 = vpow.pop %v1755
        %v1757 = vmul.f32 %v1731, 1.442695
        %v1758 = vpow.pop %v1757
        %v1759 = vmul.f32 %v1732, 1.442695
        %v1760 = vpow.pop %v1759
        %v1761 = vmul.f32 %v1733, 1.442695
        %v1762 = vpow.pop %v1761
        %v1763 = vmul.f32 %v1734, 1.442695
        %v1764 = vpow.pop %v1763
        %v1765 = vmul.f32 %v1735, 1.442695
        %v1766 = vpow.pop %v1765
        %v1767 = vmul.f32 %v1736, 1.442695
        %v1768 = vpow.pop %v1767
        %v1769 = vadd.f32 %v1738, 1.0
        %v1770 = vadd.f32 %v1740, 1.0
        %v1771 = vadd.f32 %v1742, 1.0
        %v1772 = vadd.f32 %v1744, 1.0
        %v1773 = vadd.f32 %v1746, 1.0
        %v1774 = vadd.f32 %v1748, 1.0
        %v1775 = vadd.f32 %v1750, 1.0
        %v1776 = vadd.f32 %v1752, 1.0
        %v1777 = vadd.f32 %v1754, 1.0
        %v1778 = vadd.f32 %v1756, 1.0
        %v1779 = vadd.f32 %v1758, 1.0
        %v1780 = vadd.f32 %v1760, 1.0
        %v1781 = vadd.f32 %v1762, 1.0
        %v1782 = vadd.f32 %v1764, 1.0
        %v1783 = vadd.f32 %v1766, 1.0
        %v1784 = vadd.f32 %v1768, 1.0
        %v1785 = vrcp.pop %v1769
        %v1786 = vmul.f32 1.0, %v1785
        %v1787 = vrcp.pop %v1770
        %v1788 = vmul.f32 1.0, %v1787
        %v1789 = vrcp.pop %v1771
        %v1790 = vmul.f32 1.0, %v1789
        %v1791 = vrcp.pop %v1772
        %v1792 = vmul.f32 1.0, %v1791
        %v1793 = vrcp.pop %v1773
        %v1794 = vmul.f32 1.0, %v1793
        %v1795 = vrcp.pop %v1774
        %v1796 = vmul.f32 1.0, %v1795
        %v1797 = vrcp.pop %v1775
        %v1798 = vmul.f32 1.0, %v1797
        %v1799 = vrcp.pop %v1776
        %v1800 = vmul.f32 1.0, %v1799
        %v1801 = vrcp.pop %v1777
        %v1802 = vmul.f32 1.0, %v1801
        %v1803 = vrcp.pop %v1778
        %v1804 = vmul.f32 1.0, %v1803
        %v1805 = vrcp.pop %v1779
        %v1806 = vmul.f32 1.0, %v1805
        %v1807 = vrcp.pop %v1780
        %v1808 = vmul.f32 1.0, %v1807
        %v1809 = vrcp.pop %v1781
        %v1810 = vmul.f32 1.0, %v1809
        %v1811 = vrcp.pop %v1782
        %v1812 = vmul.f32 1.0, %v1811
        %v1813 = vrcp.pop %v1783
        %v1814 = vmul.f32 1.0, %v1813
        %v1815 = vrcp.pop %v1784
        %v1816 = vmul.f32 1.0, %v1815
        %1817 = vst [vmem:[%s545] sm:$0xff] %v1786
        %1818 = vst [vmem:[%s545 + $0x8] sm:$0xff] %v1788
        %1819 = vst [vmem:[%s545 + $0x10] sm:$0xff] %v1790
        %1820 = vst [vmem:[%s545 + $0x18] sm:$0xff] %v1792
        %1821 = vst [vmem:[%s545 + $0x20] sm:$0xff] %v1794
        %1822 = vst [vmem:[%s545 + $0x28] sm:$0xff] %v1796
        %1823 = vst [vmem:[%s545 + $0x30] sm:$0xff] %v1798
        %1824 = vst [vmem:[%s545 + $0x38] sm:$0xff] %v1800
        %1825 = vst [vmem:[%s545 + $0x40] sm:$0xff] %v1802
        %1826 = vst [vmem:[%s545 + $0x48] sm:$0xff] %v1804
        %1827 = vst [vmem:[%s545 + $0x50] sm:$0xff] %v1806
        %1828 = vst [vmem:[%s545 + $0x58] sm:$0xff] %v1808
        %1829 = vst [vmem:[%s545 + $0x60] sm:$0xff] %v1810
        %1830 = vst [vmem:[%s545 + $0x68] sm:$0xff] %v1812
        %1831 = vst [vmem:[%s545 + $0x70] sm:$0xff] %v1814
        %1832 = vst [vmem:[%s545 + $0x78] sm:$0xff] %v1816
        %s1833 = sand.u32 %s319, 1
        %s1834 = scalar_lea.sflag [#allocation4], %s1833
        %s1835 = sand.u32 %s319, 1
        %s1836 = smul.addr %s1835, 128
        %s1837 = scalar_lea.vmem [#allocation14], %s1836
        // Predicated region
        $region101: #{tpu_custom_call.1} parent=71 // pred_check
          %p1838 = pneg %p329
        $region102: #{tpu_custom_call.1} parent=71 // pred_check_branch
          %1840 = sbr.rel (%p1838) target = $region104
        $region103: #{tpu_custom_call.1} parent=71 // pred_region
          %s1841 = smul.u32 16, %s33
          %s1843 = ssub.s32 2048, 2048
          %1844 = vsyncadd %s1834, %s1843
          %s1845 = smul.addr %s1841, 128
          %s1846 = scalar_lea.hbm %s13, %s1845
          %s1847 = sshll.u32 %s1837, 4
          %s1848 = int_to_ptr.vmem [resolvable:$true] %s1847
          %1853 = dma.vmem_to_hbm [thread:$0]  %s1848, 2048, %s1846, %s1834, 128, 128, 8
        $region104: #{tpu_custom_call.1} parent=71 // pred_fallthru
          _
      $region72: #{tpu_custom_call.1} parent=5 // pred_fallthru
        _
      %p1854 = scmp.le.s32.totalorder 2, %s28
      // Predicated region
      $region105: #{tpu_custom_call.1} parent=5 // pred_check
        %p1855 = pneg %p1854
      $region106: #{tpu_custom_call.1} parent=5 // pred_check_branch
        %1857 = sbr.rel (%p1855) target = $region108
      $region107: #{tpu_custom_call.1} parent=5 // pred_region
        %s1858 = ssub.s32 %s28, 2
        // Predicated region
        $region109: #{tpu_custom_call.1} parent=107 // pred_check
          %p1859 = pneg %p335
        $region110: #{tpu_custom_call.1} parent=107 // pred_check_branch
          %1861 = sbr.rel (%p1859) target = $region112
        $region111: #{tpu_custom_call.1} parent=107 // pred_region
          %s1862 = sand.u32 %s320, 1
          %s1863 = scalar_lea.sflag [#allocation4], %s1862
          %s1864 = sand.u32 %s320, 1
          %s1865 = smul.addr %s1864, 128
          %s1866 = scalar_lea.vmem [#allocation14], %s1865
          %1867 = dma.done %s1863, 2048
        $region112: #{tpu_custom_call.1} parent=107 // pred_fallthru
          _
      $region108: #{tpu_custom_call.1} parent=5 // pred_fallthru
        _
    $region6: #{tpu_custom_call.1} parent=1 // loop_footer
      %s32 = sadd.s32 1, %s28
    $region7: #{tpu_custom_call.1} parent=1 // loop_footer_branch
      %27 = sbr.rel target = $region3
    $region8: #{tpu_custom_call.1} parent=1 // loop_exit
      _
    %1868 = vsyncpa [#allocation3], 1
    %s1869 = scalar_lea.sflag [#allocation3], 1
    %1870 = vsyncpa %s1869, 1
    %1871 = vsyncpa [#allocation6], 1
    %1872 = vsyncpa [#allocation9], 1
    %1873 = vsyncpa [#allocation12], 1
    %1874 = vsyncpa [#allocation4], 1
    %s1875 = scalar_lea.sflag [#allocation4], 1
    %1876 = vsyncpa %s1875, 1

</llo_original>
